<compile_context>
chip_gen: v6e
topology: v6e:2x2x1
jax: 0.10.0
libtpu: 0.0.40
codegen_flags: <defaults>
</compile_context>

<pallas_src>
import math

import jax
import jax.numpy as jnp
import numpy as np
from jax.experimental import pallas as pl
from jax.experimental.pallas import tpu as pltpu

HIDDEN = 16
LANES = 128              # lane width of every block (full vreg lanes)
SUB = 8                  # f32 sublane tile; chunk height inside the learn kernel
STACK = HIDDEN * SUB     # 128: stacked hidden tile height / kron matrix size
LEARN_BLOCK_ROWS = 512   # rows per 'learn' grid step (512*128*4B = 256 KiB f32)
GAMMA_BLOCK_ROWS = 2048  # rows per 'gamma' grid step (2048*128*4B = 1 MiB f32)

# Offsets into the packed scalar vector (lives in SMEM inside the kernel).
_W1, _B1, _B2, _B3, _W4 = 0, HIDDEN, 2 * HIDDEN, 3 * HIDDEN, 4 * HIDDEN
_B4 = 5 * HIDDEN
_NSCAL = _B4 + 1          # 81


# ----------------------------- Pallas kernels ------------------------------

def _learn_kernel(x_ref, m2_ref, m3_ref, p_ref, o_ref):
    """x_ref/o_ref: (TB, 128) block in VMEM; m2_ref/m3_ref: (128, 128) bf16
    kron(W^T, I_8) matrices in VMEM; p_ref: (81,) f32 scalars in SMEM."""
    n_chunks = x_ref.shape[0] // SUB

    # Hoist every loop-invariant read out of the per-chunk loop: the two MXU
    # operands and all SMEM scalars (JAX does not CSE/hoist these broadcasts
    # if they sit inside the fori_loop body).
    m2 = m2_ref[...]
    m3 = m3_ref[...]
    w1 = [p_ref[_W1 + j] for j in range(HIDDEN)]
    b1 = [p_ref[_B1 + j] for j in range(HIDDEN)]
    b2 = [p_ref[_B2 + j] for j in range(HIDDEN)]
    b3 = [p_ref[_B3 + j] for j in range(HIDDEN)]
    w4 = [p_ref[_W4 + j] for j in range(HIDDEN)]   # 0.1 * w4 (folded host-side)
    b4 = p_ref[_B4]                                # 0.1 * b4 (folded host-side)

    def body(c, carry):
        r0 = pl.multiple_of(c * SUB, SUB)
        x = x_ref[pl.ds(r0, SUB), :].astype(jnp.float32)           # (8, 128)

        # layer 1 (VPU): h1[j] = relu(w1[j]*x + b1[j]); stack the 16 planes
        # into one (128,128) tile (8-row f32 pieces are vreg-aligned).
        h1 = jnp.concatenate(
            [jnp.maximum(w1[j] * x + b1[j], 0.0) for j in range(HIDDEN)],
            axis=0)                                                 # (128, 128)

        # layer 2 (MXU): (W2^T kron I_8) @ H1, bf16 operands, f32 accumulate.
        mm2 = jnp.dot(m2, h1.astype(jnp.bfloat16),
                      preferred_element_type=jnp.float32)           # (128, 128)
        h2 = jnp.concatenate(
            [jnp.maximum(mm2[k * SUB:(k + 1) * SUB, :] + b2[k], 0.0)
             for k in range(HIDDEN)], axis=0)                       # (128, 128)

        # layer 3 (MXU) fused with layer 4 (VPU, 16 -> 1): per-plane bias+relu,
        # then the 0.1*w4-weighted reduction over the 16 planes.
        mm3 = jnp.dot(m3, h2.astype(jnp.bfloat16),
                      preferred_element_type=jnp.float32)           # (128, 128)
        res = jnp.maximum(mm3[0:SUB, :] + b3[0], 0.0) * w4[0]
        for k in range(1, HIDDEN):
            res = res + jnp.maximum(
                mm3[k * SUB:(k + 1) * SUB, :] + b3[k], 0.0) * w4[k]

        # residual + sigmoid (0.5*tanh(0.5*z)+0.5 keeps the transcendental on
        # the EUP, no divide), cast in-register (lane-dense store).
        z = res + b4 + x
        o_ref[pl.ds(r0, SUB), :] = (
            0.5 * jnp.tanh(0.5 * z) + 0.5).astype(o_ref.dtype)
        return carry

    jax.lax.fori_loop(0, n_chunks, body, 0)


def _gamma_kernel(x_ref, o_ref):
    xf = x_ref[...].astype(jnp.float32)
    # Exactly one log + one exp on the EUP.  Same semantics as torch's pow:
    # 0 -> 0, negative inputs -> NaN.
    o_ref[...] = jnp.exp(jnp.log(xf) * (1.0 / 2.2)).astype(o_ref.dtype)


# ------------------------------ Parameters ---------------------------------

def init_tone_mapping_params(key):
    """nn.Linear(1,16)->(16,16)->(16,16)->(16,1), PyTorch-default-like uniform
    init (deterministic); weights stored transposed as (in, out)."""
    dims = [(1, HIDDEN), (HIDDEN, HIDDEN), (HIDDEN, HIDDEN), (HIDDEN, 1)]
    params = []
    for fan_in, fan_out in dims:
        key, kw, kb = jax.random.split(key, 3)
        bound = 1.0 / math.sqrt(fan_in)
        w = jax.random.uniform(kw, (fan_in, fan_out), jnp.float32, -bound, bound)
        b = jax.random.uniform(kb, (1, fan_out), jnp.float32, -bound, bound)
        params.append((w, b))
    return params


def _pack_learn_operands(params):
    """Host-side prep: (W2^T kron I_8) / (W3^T kron I_8) as (128,128) bf16 MXU
    operands, plus a packed f32 scalar vector [w1, b1, b2, b3, 0.1*w4, 0.1*b4]
    for SMEM (the 0.1 residual scale is folded into the last layer)."""
    (w1, b1), (w2, b2), (w3, b3), (w4, b4) = params
    eye = jnp.eye(SUB, dtype=jnp.float32)
    m2 = jnp.kron(w2.T.astype(jnp.float32), eye).astype(jnp.bfloat16)  # (128,128)
    m3 = jnp.kron(w3.T.astype(jnp.float32), eye).astype(jnp.bfloat16)  # (128,128)
    scal = jnp.concatenate([
        w1.reshape(-1), b1.reshape(-1), b2.reshape(-1), b3.reshape(-1),
        (0.1 * w4).reshape(-1), (0.1 * b4).reshape(-1),
    ]).astype(jnp.float32)
    assert scal.shape[0] == _NSCAL
    return m2, m3, scal


# ------------------------------- Wrappers -----------------------------------

def _round_up(v, m):
    return ((v + m - 1) // m) * m


def _to_lane_dense(x):
    """Flatten x into a lane-dense (rows, 128) slab with rows % 8 == 0.
    No copy at all when x.size is already a multiple of 1024; otherwise pads
    at most 1023 elements (and only then is the result sliced)."""
    flat = x.reshape(-1)
    n = flat.shape[0]
    rows = _round_up(pl.cdiv(n, LANES), SUB)
    padded = rows * LANES != n
    if padded:
        flat = jnp.pad(flat, (0, rows * LANES - n))
    return flat.reshape(rows, LANES), n, padded


def _pick_block_rows(rows, cap):
    """Largest multiple-of-8 block <= cap, shrunk so the 1-D 'parallel' grid
    has >= 2 steps whenever possible (lets v7x shard across both TensorCores;
    no effect on v5e/v6e)."""
    tb = min(cap, rows)
    while tb > SUB and pl.cdiv(rows, tb) < 2:
        tb = _round_up(tb // 2, SUB)
    return tb


def tone_mapping_learn(x, params):
    if x.size == 0:
        return x
    ori_shape = x.shape
    x2d, n, padded = _to_lane_dense(x)
    rows = x2d.shape[0]
    tb = _pick_block_rows(rows, LEARN_BLOCK_ROWS)
    m2, m3, scal = _pack_learn_operands(params)

    out = pl.pallas_call(
        _learn_kernel,
        out_shape=jax.ShapeDtypeStruct((rows, LANES), x.dtype),
        grid_spec=pltpu.PrefetchScalarGridSpec(
            num_scalar_prefetch=0,
            grid=(pl.cdiv(rows, tb),),
            in_specs=[
                pl.BlockSpec((tb, LANES), lambda i: (i, 0)),
                pl.BlockSpec((STACK, STACK), lambda i: (0, 0)),   # kron(W2^T, I8)
                pl.BlockSpec((STACK, STACK), lambda i: (0, 0)),   # kron(W3^T, I8)
                pl.BlockSpec(memory_space=pltpu.MemorySpace.SMEM),
            ],
            out_specs=pl.BlockSpec((tb, LANES), lambda i: (i, 0)),
        ),
        compiler_params=pltpu.CompilerParams(
            dimension_semantics=("parallel",)),
    )(x2d, m2, m3, scal)

    out = out.reshape(-1)
    if padded:
        out = out[:n]
    return out.reshape(ori_shape)


def tone_mapping_gamma(x):
    if x.size == 0:
        return x
    ori_shape = x.shape
    x2d, n, padded = _to_lane_dense(x)
    rows = x2d.shape[0]
    tb = _pick_block_rows(rows, GAMMA_BLOCK_ROWS)

    out = pl.pallas_call(
        _gamma_kernel,
        out_shape=jax.ShapeDtypeStruct((rows, LANES), x.dtype),
        grid_spec=pltpu.PrefetchScalarGridSpec(
            num_scalar_prefetch=0,
            grid=(pl.cdiv(rows, tb),),
            in_specs=[pl.BlockSpec((tb, LANES), lambda i: (i, 0))],
            out_specs=pl.BlockSpec((tb, LANES), lambda i: (i, 0)),
        ),
        compiler_params=pltpu.CompilerParams(
            dimension_semantics=("parallel",)),
    )(x2d)

    out = out.reshape(-1)
    if padded:
        out = out[:n]
    return out.reshape(ori_shape)


def tone_mapping(x, map_type, params=None):
    assert map_type in ("none", "gamma", "learn")
    if map_type == "none":
        return x
    if map_type == "gamma":
        return tone_mapping_gamma(x)
    return tone_mapping_learn(x, params)


# ---------------------- pure-JAX reference ('learn') -----------------------

def _learn_ref(x, params):
    ori_shape = x.shape
    x_in = x.reshape(-1, 1).astype(jnp.float32)
    (w1, b1), (w2, b2), (w3, b3), (w4, b4) = params
    hp = jax.lax.Precision.HIGHEST
    h = jnp.maximum(jnp.dot(x_in, w1, precision=hp) + b1, 0.0)
    h = jnp.maximum(jnp.dot(h, w2, precision=hp) + b2, 0.0)
    h = jnp.maximum(jnp.dot(h, w3, precision=hp) + b3, 0.0)
    res = jnp.dot(h, w4, precision=hp) + b4
    return jax.nn.sigmoid(res * 0.1 + x_in).reshape(ori_shape).astype(x.dtype)


if __name__ == "__main__":
    key = jax.random.PRNGKey(0)
    key, kx, kx2 = jax.random.split(key, 3)
    x = jax.random.uniform(kx, (2, 4, 16, 16), jnp.float32)     # 2048 elems (aligned path)
    x_odd = jax.random.uniform(kx2, (3, 7, 25), jnp.float32)    # 525 elems (padded path)

    params = init_tone_mapping_params(key)

    # 'learn' (bf16 MXU passes -> ~1e-3-level agreement with the f32 reference)
    y_learn = jax.block_until_ready(tone_mapping(x, "learn", params))
    np.testing.assert_allclose(np.asarray(y_learn), np.asarray(_learn_ref(x, params)),
                               rtol=0.0, atol=5e-3)
    y_learn_odd = jax.block_until_ready(tone_mapping(x_odd, "learn", params))
    np.testing.assert_allclose(np.asarray(y_learn_odd),
                               np.asarray(_learn_ref(x_odd, params)),
                               rtol=0.0, atol=5e-3)

    # 'gamma'
    y_gamma = jax.block_until_ready(tone_mapping(x, "gamma"))
    np.testing.assert_allclose(np.asarray(y_gamma),
                               np.asarray(x) ** (1.0 / 2.2),
                               rtol=1e-4, atol=1e-6)
    y_gamma_odd = jax.block_until_ready(tone_mapping(x_odd, "gamma"))
    np.testing.assert_allclose(np.asarray(y_gamma_odd),
                               np.asarray(x_odd) ** (1.0 / 2.2),
                               rtol=1e-4, atol=1e-6)

    # 'none'
    y_none = tone_mapping(x, "none")
    assert y_none.shape == x.shape and y_none.dtype == x.dtype

    print("KERNEL_OK")
</pallas_src>

<mosaic_0001>
module attributes {stable_mosaic.version = 11 : i64} {
  func.func @_learn_kernel(%arg0: i32, %arg1: memref<8x128xf32, #tpu.memory_space<vmem>>, %arg2: memref<128x128xbf16, #tpu.memory_space<vmem>>, %arg3: memref<128x128xbf16, #tpu.memory_space<vmem>>, %arg4: memref<81xf32, #tpu.memory_space<smem>>, %arg5: memref<8x128xf32, #tpu.memory_space<vmem>>) attributes {dimension_semantics = [#tpu.dimension_semantics<parallel>], iteration_bounds = array<i64: 2>, scalar_prefetch = 0 : i64, scratch_operands = 0 : i64, tpu.core_type = #tpu.core_type<tc>, window_params = [{transform_indices = @transform_0, window_bounds = array<i64: 8, 128>}, {pipeline_mode = #tpu.pipeline_mode<synchronous>, transform_indices = @transform_1, window_bounds = array<i64: 128, 128>}, {pipeline_mode = #tpu.pipeline_mode<synchronous>, transform_indices = @transform_2, window_bounds = array<i64: 128, 128>}, {transform_indices = @transform_3, window_bounds = array<i64: 81>}, {transform_indices = @transform_4, window_bounds = array<i64: 8, 128>}]} {
    %c0 = arith.constant 0 : index
    %c0_0 = arith.constant 0 : index
    %0 = vector.load %arg2[%c0, %c0_0] : memref<128x128xbf16, #tpu.memory_space<vmem>>, vector<128x128xbf16>
    %c0_1 = arith.constant 0 : index
    %c0_2 = arith.constant 0 : index
    %1 = vector.load %arg3[%c0_1, %c0_2] : memref<128x128xbf16, #tpu.memory_space<vmem>>, vector<128x128xbf16>
    %c0_3 = arith.constant 0 : index
    %2 = memref.load %arg4[%c0_3] : memref<81xf32, #tpu.memory_space<smem>>
    %c1 = arith.constant 1 : index
    %3 = memref.load %arg4[%c1] : memref<81xf32, #tpu.memory_space<smem>>
    %c2 = arith.constant 2 : index
    %4 = memref.load %arg4[%c2] : memref<81xf32, #tpu.memory_space<smem>>
    %c3 = arith.constant 3 : index
    %5 = memref.load %arg4[%c3] : memref<81xf32, #tpu.memory_space<smem>>
    %c4 = arith.constant 4 : index
    %6 = memref.load %arg4[%c4] : memref<81xf32, #tpu.memory_space<smem>>
    %c5 = arith.constant 5 : index
    %7 = memref.load %arg4[%c5] : memref<81xf32, #tpu.memory_space<smem>>
    %c6 = arith.constant 6 : index
    %8 = memref.load %arg4[%c6] : memref<81xf32, #tpu.memory_space<smem>>
    %c7 = arith.constant 7 : index
    %9 = memref.load %arg4[%c7] : memref<81xf32, #tpu.memory_space<smem>>
    %c8 = arith.constant 8 : index
    %10 = memref.load %arg4[%c8] : memref<81xf32, #tpu.memory_space<smem>>
    %c9 = arith.constant 9 : index
    %11 = memref.load %arg4[%c9] : memref<81xf32, #tpu.memory_space<smem>>
    %c10 = arith.constant 10 : index
    %12 = memref.load %arg4[%c10] : memref<81xf32, #tpu.memory_space<smem>>
    %c11 = arith.constant 11 : index
    %13 = memref.load %arg4[%c11] : memref<81xf32, #tpu.memory_space<smem>>
    %c12 = arith.constant 12 : index
    %14 = memref.load %arg4[%c12] : memref<81xf32, #tpu.memory_space<smem>>
    %c13 = arith.constant 13 : index
    %15 = memref.load %arg4[%c13] : memref<81xf32, #tpu.memory_space<smem>>
    %c14 = arith.constant 14 : index
    %16 = memref.load %arg4[%c14] : memref<81xf32, #tpu.memory_space<smem>>
    %c15 = arith.constant 15 : index
    %17 = memref.load %arg4[%c15] : memref<81xf32, #tpu.memory_space<smem>>
    %c16 = arith.constant 16 : index
    %18 = memref.load %arg4[%c16] : memref<81xf32, #tpu.memory_space<smem>>
    %c17 = arith.constant 17 : index
    %19 = memref.load %arg4[%c17] : memref<81xf32, #tpu.memory_space<smem>>
    %c18 = arith.constant 18 : index
    %20 = memref.load %arg4[%c18] : memref<81xf32, #tpu.memory_space<smem>>
    %c19 = arith.constant 19 : index
    %21 = memref.load %arg4[%c19] : memref<81xf32, #tpu.memory_space<smem>>
    %c20 = arith.constant 20 : index
    %22 = memref.load %arg4[%c20] : memref<81xf32, #tpu.memory_space<smem>>
    %c21 = arith.constant 21 : index
    %23 = memref.load %arg4[%c21] : memref<81xf32, #tpu.memory_space<smem>>
    %c22 = arith.constant 22 : index
    %24 = memref.load %arg4[%c22] : memref<81xf32, #tpu.memory_space<smem>>
    %c23 = arith.constant 23 : index
    %25 = memref.load %arg4[%c23] : memref<81xf32, #tpu.memory_space<smem>>
    %c24 = arith.constant 24 : index
    %26 = memref.load %arg4[%c24] : memref<81xf32, #tpu.memory_space<smem>>
    %c25 = arith.constant 25 : index
    %27 = memref.load %arg4[%c25] : memref<81xf32, #tpu.memory_space<smem>>
    %c26 = arith.constant 26 : index
    %28 = memref.load %arg4[%c26] : memref<81xf32, #tpu.memory_space<smem>>
    %c27 = arith.constant 27 : index
    %29 = memref.load %arg4[%c27] : memref<81xf32, #tpu.memory_space<smem>>
    %c28 = arith.constant 28 : index
    %30 = memref.load %arg4[%c28] : memref<81xf32, #tpu.memory_space<smem>>
    %c29 = arith.constant 29 : index
    %31 = memref.load %arg4[%c29] : memref<81xf32, #tpu.memory_space<smem>>
    %c30 = arith.constant 30 : index
    %32 = memref.load %arg4[%c30] : memref<81xf32, #tpu.memory_space<smem>>
    %c31 = arith.constant 31 : index
    %33 = memref.load %arg4[%c31] : memref<81xf32, #tpu.memory_space<smem>>
    %c32 = arith.constant 32 : index
    %34 = memref.load %arg4[%c32] : memref<81xf32, #tpu.memory_space<smem>>
    %c33 = arith.constant 33 : index
    %35 = memref.load %arg4[%c33] : memref<81xf32, #tpu.memory_space<smem>>
    %c34 = arith.constant 34 : index
    %36 = memref.load %arg4[%c34] : memref<81xf32, #tpu.memory_space<smem>>
    %c35 = arith.constant 35 : index
    %37 = memref.load %arg4[%c35] : memref<81xf32, #tpu.memory_space<smem>>
    %c36 = arith.constant 36 : index
    %38 = memref.load %arg4[%c36] : memref<81xf32, #tpu.memory_space<smem>>
    %c37 = arith.constant 37 : index
    %39 = memref.load %arg4[%c37] : memref<81xf32, #tpu.memory_space<smem>>
    %c38 = arith.constant 38 : index
    %40 = memref.load %arg4[%c38] : memref<81xf32, #tpu.memory_space<smem>>
    %c39 = arith.constant 39 : index
    %41 = memref.load %arg4[%c39] : memref<81xf32, #tpu.memory_space<smem>>
    %c40 = arith.constant 40 : index
    %42 = memref.load %arg4[%c40] : memref<81xf32, #tpu.memory_space<smem>>
    %c41 = arith.constant 41 : index
    %43 = memref.load %arg4[%c41] : memref<81xf32, #tpu.memory_space<smem>>
    %c42 = arith.constant 42 : index
    %44 = memref.load %arg4[%c42] : memref<81xf32, #tpu.memory_space<smem>>
    %c43 = arith.constant 43 : index
    %45 = memref.load %arg4[%c43] : memref<81xf32, #tpu.memory_space<smem>>
    %c44 = arith.constant 44 : index
    %46 = memref.load %arg4[%c44] : memref<81xf32, #tpu.memory_space<smem>>
    %c45 = arith.constant 45 : index
    %47 = memref.load %arg4[%c45] : memref<81xf32, #tpu.memory_space<smem>>
    %c46 = arith.constant 46 : index
    %48 = memref.load %arg4[%c46] : memref<81xf32, #tpu.memory_space<smem>>
    %c47 = arith.constant 47 : index
    %49 = memref.load %arg4[%c47] : memref<81xf32, #tpu.memory_space<smem>>
    %c48 = arith.constant 48 : index
    %50 = memref.load %arg4[%c48] : memref<81xf32, #tpu.memory_space<smem>>
    %c49 = arith.constant 49 : index
    %51 = memref.load %arg4[%c49] : memref<81xf32, #tpu.memory_space<smem>>
    %c50 = arith.constant 50 : index
    %52 = memref.load %arg4[%c50] : memref<81xf32, #tpu.memory_space<smem>>
    %c51 = arith.constant 51 : index
    %53 = memref.load %arg4[%c51] : memref<81xf32, #tpu.memory_space<smem>>
    %c52 = arith.constant 52 : index
    %54 = memref.load %arg4[%c52] : memref<81xf32, #tpu.memory_space<smem>>
    %c53 = arith.constant 53 : index
    %55 = memref.load %arg4[%c53] : memref<81xf32, #tpu.memory_space<smem>>
    %c54 = arith.constant 54 : index
    %56 = memref.load %arg4[%c54] : memref<81xf32, #tpu.memory_space<smem>>
    %c55 = arith.constant 55 : index
    %57 = memref.load %arg4[%c55] : memref<81xf32, #tpu.memory_space<smem>>
    %c56 = arith.constant 56 : index
    %58 = memref.load %arg4[%c56] : memref<81xf32, #tpu.memory_space<smem>>
    %c57 = arith.constant 57 : index
    %59 = memref.load %arg4[%c57] : memref<81xf32, #tpu.memory_space<smem>>
    %c58 = arith.constant 58 : index
    %60 = memref.load %arg4[%c58] : memref<81xf32, #tpu.memory_space<smem>>
    %c59 = arith.constant 59 : index
    %61 = memref.load %arg4[%c59] : memref<81xf32, #tpu.memory_space<smem>>
    %c60 = arith.constant 60 : index
    %62 = memref.load %arg4[%c60] : memref<81xf32, #tpu.memory_space<smem>>
    %c61 = arith.constant 61 : index
    %63 = memref.load %arg4[%c61] : memref<81xf32, #tpu.memory_space<smem>>
    %c62 = arith.constant 62 : index
    %64 = memref.load %arg4[%c62] : memref<81xf32, #tpu.memory_space<smem>>
    %c63 = arith.constant 63 : index
    %65 = memref.load %arg4[%c63] : memref<81xf32, #tpu.memory_space<smem>>
    %c64 = arith.constant 64 : index
    %66 = memref.load %arg4[%c64] : memref<81xf32, #tpu.memory_space<smem>>
    %c65 = arith.constant 65 : index
    %67 = memref.load %arg4[%c65] : memref<81xf32, #tpu.memory_space<smem>>
    %c66 = arith.constant 66 : index
    %68 = memref.load %arg4[%c66] : memref<81xf32, #tpu.memory_space<smem>>
    %c67 = arith.constant 67 : index
    %69 = memref.load %arg4[%c67] : memref<81xf32, #tpu.memory_space<smem>>
    %c68 = arith.constant 68 : index
    %70 = memref.load %arg4[%c68] : memref<81xf32, #tpu.memory_space<smem>>
    %c69 = arith.constant 69 : index
    %71 = memref.load %arg4[%c69] : memref<81xf32, #tpu.memory_space<smem>>
    %c70 = arith.constant 70 : index
    %72 = memref.load %arg4[%c70] : memref<81xf32, #tpu.memory_space<smem>>
    %c71 = arith.constant 71 : index
    %73 = memref.load %arg4[%c71] : memref<81xf32, #tpu.memory_space<smem>>
    %c72 = arith.constant 72 : index
    %74 = memref.load %arg4[%c72] : memref<81xf32, #tpu.memory_space<smem>>
    %c73 = arith.constant 73 : index
    %75 = memref.load %arg4[%c73] : memref<81xf32, #tpu.memory_space<smem>>
    %c74 = arith.constant 74 : index
    %76 = memref.load %arg4[%c74] : memref<81xf32, #tpu.memory_space<smem>>
    %c75 = arith.constant 75 : index
    %77 = memref.load %arg4[%c75] : memref<81xf32, #tpu.memory_space<smem>>
    %c76 = arith.constant 76 : index
    %78 = memref.load %arg4[%c76] : memref<81xf32, #tpu.memory_space<smem>>
    %c77 = arith.constant 77 : index
    %79 = memref.load %arg4[%c77] : memref<81xf32, #tpu.memory_space<smem>>
    %c78 = arith.constant 78 : index
    %80 = memref.load %arg4[%c78] : memref<81xf32, #tpu.memory_space<smem>>
    %c79 = arith.constant 79 : index
    %81 = memref.load %arg4[%c79] : memref<81xf32, #tpu.memory_space<smem>>
    %c80 = arith.constant 80 : index
    %82 = memref.load %arg4[%c80] : memref<81xf32, #tpu.memory_space<smem>>
    %c0_i32 = arith.constant 0 : i32
    %c8_i32 = arith.constant 8 : i32
    %83 = arith.muli %c0_i32, %c8_i32 : i32
    %84 = tpu.assume_multiple %83, 8 : i32
    %85 = arith.index_cast %84 : i32 to index
    %c0_4 = arith.constant 0 : index
    %86 = vector.load %arg1[%85, %c0_4] : memref<8x128xf32, #tpu.memory_space<vmem>>, vector<8x128xf32>
    %87 = vector.broadcast %2 : f32 to vector<8x128xf32>
    %88 = arith.mulf %87, %86 : vector<8x128xf32>
    %89 = vector.broadcast %18 : f32 to vector<8x128xf32>
    %90 = arith.addf %88, %89 : vector<8x128xf32>
    %cst = arith.constant 0.000000e+00 : f32
    %91 = vector.broadcast %cst : f32 to vector<8x128xf32>
    %92 = arith.maximumf %90, %91 : vector<8x128xf32>
    %93 = vector.broadcast %3 : f32 to vector<8x128xf32>
    %94 = arith.mulf %93, %86 : vector<8x128xf32>
    %95 = vector.broadcast %19 : f32 to vector<8x128xf32>
    %96 = arith.addf %94, %95 : vector<8x128xf32>
    %cst_5 = arith.constant 0.000000e+00 : f32
    %97 = vector.broadcast %cst_5 : f32 to vector<8x128xf32>
    %98 = arith.maximumf %96, %97 : vector<8x128xf32>
    %99 = vector.broadcast %4 : f32 to vector<8x128xf32>
    %100 = arith.mulf %99, %86 : vector<8x128xf32>
    %101 = vector.broadcast %20 : f32 to vector<8x128xf32>
    %102 = arith.addf %100, %101 : vector<8x128xf32>
    %cst_6 = arith.constant 0.000000e+00 : f32
    %103 = vector.broadcast %cst_6 : f32 to vector<8x128xf32>
    %104 = arith.maximumf %102, %103 : vector<8x128xf32>
    %105 = vector.broadcast %5 : f32 to vector<8x128xf32>
    %106 = arith.mulf %105, %86 : vector<8x128xf32>
    %107 = vector.broadcast %21 : f32 to vector<8x128xf32>
    %108 = arith.addf %106, %107 : vector<8x128xf32>
    %cst_7 = arith.constant 0.000000e+00 : f32
    %109 = vector.broadcast %cst_7 : f32 to vector<8x128xf32>
    %110 = arith.maximumf %108, %109 : vector<8x128xf32>
    %111 = vector.broadcast %6 : f32 to vector<8x128xf32>
    %112 = arith.mulf %111, %86 : vector<8x128xf32>
    %113 = vector.broadcast %22 : f32 to vector<8x128xf32>
    %114 = arith.addf %112, %113 : vector<8x128xf32>
    %cst_8 = arith.constant 0.000000e+00 : f32
    %115 = vector.broadcast %cst_8 : f32 to vector<8x128xf32>
    %116 = arith.maximumf %114, %115 : vector<8x128xf32>
    %117 = vector.broadcast %7 : f32 to vector<8x128xf32>
    %118 = arith.mulf %117, %86 : vector<8x128xf32>
    %119 = vector.broadcast %23 : f32 to vector<8x128xf32>
    %120 = arith.addf %118, %119 : vector<8x128xf32>
    %cst_9 = arith.constant 0.000000e+00 : f32
    %121 = vector.broadcast %cst_9 : f32 to vector<8x128xf32>
    %122 = arith.maximumf %120, %121 : vector<8x128xf32>
    %123 = vector.broadcast %8 : f32 to vector<8x128xf32>
    %124 = arith.mulf %123, %86 : vector<8x128xf32>
    %125 = vector.broadcast %24 : f32 to vector<8x128xf32>
    %126 = arith.addf %124, %125 : vector<8x128xf32>
    %cst_10 = arith.constant 0.000000e+00 : f32
    %127 = vector.broadcast %cst_10 : f32 to vector<8x128xf32>
    %128 = arith.maximumf %126, %127 : vector<8x128xf32>
    %129 = vector.broadcast %9 : f32 to vector<8x128xf32>
    %130 = arith.mulf %129, %86 : vector<8x128xf32>
    %131 = vector.broadcast %25 : f32 to vector<8x128xf32>
    %132 = arith.addf %130, %131 : vector<8x128xf32>
    %cst_11 = arith.constant 0.000000e+00 : f32
    %133 = vector.broadcast %cst_11 : f32 to vector<8x128xf32>
    %134 = arith.maximumf %132, %133 : vector<8x128xf32>
    %135 = vector.broadcast %10 : f32 to vector<8x128xf32>
    %136 = arith.mulf %135, %86 : vector<8x128xf32>
    %137 = vector.broadcast %26 : f32 to vector<8x128xf32>
    %138 = arith.addf %136, %137 : vector<8x128xf32>
    %cst_12 = arith.constant 0.000000e+00 : f32
    %139 = vector.broadcast %cst_12 : f32 to vector<8x128xf32>
    %140 = arith.maximumf %138, %139 : vector<8x128xf32>
    %141 = vector.broadcast %11 : f32 to vector<8x128xf32>
    %142 = arith.mulf %141, %86 : vector<8x128xf32>
    %143 = vector.broadcast %27 : f32 to vector<8x128xf32>
    %144 = arith.addf %142, %143 : vector<8x128xf32>
    %cst_13 = arith.constant 0.000000e+00 : f32
    %145 = vector.broadcast %cst_13 : f32 to vector<8x128xf32>
    %146 = arith.maximumf %144, %145 : vector<8x128xf32>
    %147 = vector.broadcast %12 : f32 to vector<8x128xf32>
    %148 = arith.mulf %147, %86 : vector<8x128xf32>
    %149 = vector.broadcast %28 : f32 to vector<8x128xf32>
    %150 = arith.addf %148, %149 : vector<8x128xf32>
    %cst_14 = arith.constant 0.000000e+00 : f32
    %151 = vector.broadcast %cst_14 : f32 to vector<8x128xf32>
    %152 = arith.maximumf %150, %151 : vector<8x128xf32>
    %153 = vector.broadcast %13 : f32 to vector<8x128xf32>
    %154 = arith.mulf %153, %86 : vector<8x128xf32>
    %155 = vector.broadcast %29 : f32 to vector<8x128xf32>
    %156 = arith.addf %154, %155 : vector<8x128xf32>
    %cst_15 = arith.constant 0.000000e+00 : f32
    %157 = vector.broadcast %cst_15 : f32 to vector<8x128xf32>
    %158 = arith.maximumf %156, %157 : vector<8x128xf32>
    %159 = vector.broadcast %14 : f32 to vector<8x128xf32>
    %160 = arith.mulf %159, %86 : vector<8x128xf32>
    %161 = vector.broadcast %30 : f32 to vector<8x128xf32>
    %162 = arith.addf %160, %161 : vector<8x128xf32>
    %cst_16 = arith.constant 0.000000e+00 : f32
    %163 = vector.broadcast %cst_16 : f32 to vector<8x128xf32>
    %164 = arith.maximumf %162, %163 : vector<8x128xf32>
    %165 = vector.broadcast %15 : f32 to vector<8x128xf32>
    %166 = arith.mulf %165, %86 : vector<8x128xf32>
    %167 = vector.broadcast %31 : f32 to vector<8x128xf32>
    %168 = arith.addf %166, %167 : vector<8x128xf32>
    %cst_17 = arith.constant 0.000000e+00 : f32
    %169 = vector.broadcast %cst_17 : f32 to vector<8x128xf32>
    %170 = arith.maximumf %168, %169 : vector<8x128xf32>
    %171 = vector.broadcast %16 : f32 to vector<8x128xf32>
    %172 = arith.mulf %171, %86 : vector<8x128xf32>
    %173 = vector.broadcast %32 : f32 to vector<8x128xf32>
    %174 = arith.addf %172, %173 : vector<8x128xf32>
    %cst_18 = arith.constant 0.000000e+00 : f32
    %175 = vector.broadcast %cst_18 : f32 to vector<8x128xf32>
    %176 = arith.maximumf %174, %175 : vector<8x128xf32>
    %177 = vector.broadcast %17 : f32 to vector<8x128xf32>
    %178 = arith.mulf %177, %86 : vector<8x128xf32>
    %179 = vector.broadcast %33 : f32 to vector<8x128xf32>
    %180 = arith.addf %178, %179 : vector<8x128xf32>
    %cst_19 = arith.constant 0.000000e+00 : f32
    %181 = vector.broadcast %cst_19 : f32 to vector<8x128xf32>
    %182 = arith.maximumf %180, %181 : vector<8x128xf32>
    %183 = tpu.concatenate %92, %98, %104, %110, %116, %122, %128, %134, %140, %146, %152, %158, %164, %170, %176, %182 in 0 : vector<8x128xf32>, vector<8x128xf32>, vector<8x128xf32>, vector<8x128xf32>, vector<8x128xf32>, vector<8x128xf32>, vector<8x128xf32>, vector<8x128xf32>, vector<8x128xf32>, vector<8x128xf32>, vector<8x128xf32>, vector<8x128xf32>, vector<8x128xf32>, vector<8x128xf32>, vector<8x128xf32>, vector<8x128xf32> -> vector<128x128xf32>
    %184 = arith.truncf %183 : vector<128x128xf32> to vector<128x128xbf16>
    %cst_20 = arith.constant dense<0.000000e+00> : vector<128x128xf32>
    %185 = tpu.matmul %0, %184, %cst_20 {dimension_numbers = #tpu.dot_dimension_numbers<[1], [0], [0], [1], [0, 0, 1, 1], [], []>} : vector<128x128xbf16>, vector<128x128xbf16>, vector<128x128xf32> -> vector<128x128xf32>
    %186 = vector.extract_strided_slice %185 {offsets = [0, 0], sizes = [8, 128], strides = [1, 1]} : vector<128x128xf32> to vector<8x128xf32>
    %187 = vector.broadcast %34 : f32 to vector<8x128xf32>
    %188 = arith.addf %186, %187 : vector<8x128xf32>
    %cst_21 = arith.constant 0.000000e+00 : f32
    %189 = vector.broadcast %cst_21 : f32 to vector<8x128xf32>
    %190 = arith.maximumf %188, %189 : vector<8x128xf32>
    %191 = vector.extract_strided_slice %185 {offsets = [8, 0], sizes = [8, 128], strides = [1, 1]} : vector<128x128xf32> to vector<8x128xf32>
    %192 = vector.broadcast %35 : f32 to vector<8x128xf32>
    %193 = arith.addf %191, %192 : vector<8x128xf32>
    %cst_22 = arith.constant 0.000000e+00 : f32
    %194 = vector.broadcast %cst_22 : f32 to vector<8x128xf32>
    %195 = arith.maximumf %193, %194 : vector<8x128xf32>
    %196 = vector.extract_strided_slice %185 {offsets = [16, 0], sizes = [8, 128], strides = [1, 1]} : vector<128x128xf32> to vector<8x128xf32>
    %197 = vector.broadcast %36 : f32 to vector<8x128xf32>
    %198 = arith.addf %196, %197 : vector<8x128xf32>
    %cst_23 = arith.constant 0.000000e+00 : f32
    %199 = vector.broadcast %cst_23 : f32 to vector<8x128xf32>
    %200 = arith.maximumf %198, %199 : vector<8x128xf32>
    %201 = vector.extract_strided_slice %185 {offsets = [24, 0], sizes = [8, 128], strides = [1, 1]} : vector<128x128xf32> to vector<8x128xf32>
    %202 = vector.broadcast %37 : f32 to vector<8x128xf32>
    %203 = arith.addf %201, %202 : vector<8x128xf32>
    %cst_24 = arith.constant 0.000000e+00 : f32
    %204 = vector.broadcast %cst_24 : f32 to vector<8x128xf32>
    %205 = arith.maximumf %203, %204 : vector<8x128xf32>
    %206 = vector.extract_strided_slice %185 {offsets = [32, 0], sizes = [8, 128], strides = [1, 1]} : vector<128x128xf32> to vector<8x128xf32>
    %207 = vector.broadcast %38 : f32 to vector<8x128xf32>
    %208 = arith.addf %206, %207 : vector<8x128xf32>
    %cst_25 = arith.constant 0.000000e+00 : f32
    %209 = vector.broadcast %cst_25 : f32 to vector<8x128xf32>
    %210 = arith.maximumf %208, %209 : vector<8x128xf32>
    %211 = vector.extract_strided_slice %185 {offsets = [40, 0], sizes = [8, 128], strides = [1, 1]} : vector<128x128xf32> to vector<8x128xf32>
    %212 = vector.broadcast %39 : f32 to vector<8x128xf32>
    %213 = arith.addf %211, %212 : vector<8x128xf32>
    %cst_26 = arith.constant 0.000000e+00 : f32
    %214 = vector.broadcast %cst_26 : f32 to vector<8x128xf32>
    %215 = arith.maximumf %213, %214 : vector<8x128xf32>
    %216 = vector.extract_strided_slice %185 {offsets = [48, 0], sizes = [8, 128], strides = [1, 1]} : vector<128x128xf32> to vector<8x128xf32>
    %217 = vector.broadcast %40 : f32 to vector<8x128xf32>
    %218 = arith.addf %216, %217 : vector<8x128xf32>
    %cst_27 = arith.constant 0.000000e+00 : f32
    %219 = vector.broadcast %cst_27 : f32 to vector<8x128xf32>
    %220 = arith.maximumf %218, %219 : vector<8x128xf32>
    %221 = vector.extract_strided_slice %185 {offsets = [56, 0], sizes = [8, 128], strides = [1, 1]} : vector<128x128xf32> to vector<8x128xf32>
    %222 = vector.broadcast %41 : f32 to vector<8x128xf32>
    %223 = arith.addf %221, %222 : vector<8x128xf32>
    %cst_28 = arith.constant 0.000000e+00 : f32
    %224 = vector.broadcast %cst_28 : f32 to vector<8x128xf32>
    %225 = arith.maximumf %223, %224 : vector<8x128xf32>
    %226 = vector.extract_strided_slice %185 {offsets = [64, 0], sizes = [8, 128], strides = [1, 1]} : vector<128x128xf32> to vector<8x128xf32>
    %227 = vector.broadcast %42 : f32 to vector<8x128xf32>
    %228 = arith.addf %226, %227 : vector<8x128xf32>
    %cst_29 = arith.constant 0.000000e+00 : f32
    %229 = vector.broadcast %cst_29 : f32 to vector<8x128xf32>
    %230 = arith.maximumf %228, %229 : vector<8x128xf32>
    %231 = vector.extract_strided_slice %185 {offsets = [72, 0], sizes = [8, 128], strides = [1, 1]} : vector<128x128xf32> to vector<8x128xf32>
    %232 = vector.broadcast %43 : f32 to vector<8x128xf32>
    %233 = arith.addf %231, %232 : vector<8x128xf32>
    %cst_30 = arith.constant 0.000000e+00 : f32
    %234 = vector.broadcast %cst_30 : f32 to vector<8x128xf32>
    %235 = arith.maximumf %233, %234 : vector<8x128xf32>
    %236 = vector.extract_strided_slice %185 {offsets = [80, 0], sizes = [8, 128], strides = [1, 1]} : vector<128x128xf32> to vector<8x128xf32>
    %237 = vector.broadcast %44 : f32 to vector<8x128xf32>
    %238 = arith.addf %236, %237 : vector<8x128xf32>
    %cst_31 = arith.constant 0.000000e+00 : f32
    %239 = vector.broadcast %cst_31 : f32 to vector<8x128xf32>
    %240 = arith.maximumf %238, %239 : vector<8x128xf32>
    %241 = vector.extract_strided_slice %185 {offsets = [88, 0], sizes = [8, 128], strides = [1, 1]} : vector<128x128xf32> to vector<8x128xf32>
    %242 = vector.broadcast %45 : f32 to vector<8x128xf32>
    %243 = arith.addf %241, %242 : vector<8x128xf32>
    %cst_32 = arith.constant 0.000000e+00 : f32
    %244 = vector.broadcast %cst_32 : f32 to vector<8x128xf32>
    %245 = arith.maximumf %243, %244 : vector<8x128xf32>
    %246 = vector.extract_strided_slice %185 {offsets = [96, 0], sizes = [8, 128], strides = [1, 1]} : vector<128x128xf32> to vector<8x128xf32>
    %247 = vector.broadcast %46 : f32 to vector<8x128xf32>
    %248 = arith.addf %246, %247 : vector<8x128xf32>
    %cst_33 = arith.constant 0.000000e+00 : f32
    %249 = vector.broadcast %cst_33 : f32 to vector<8x128xf32>
    %250 = arith.maximumf %248, %249 : vector<8x128xf32>
    %251 = vector.extract_strided_slice %185 {offsets = [104, 0], sizes = [8, 128], strides = [1, 1]} : vector<128x128xf32> to vector<8x128xf32>
    %252 = vector.broadcast %47 : f32 to vector<8x128xf32>
    %253 = arith.addf %251, %252 : vector<8x128xf32>
    %cst_34 = arith.constant 0.000000e+00 : f32
    %254 = vector.broadcast %cst_34 : f32 to vector<8x128xf32>
    %255 = arith.maximumf %253, %254 : vector<8x128xf32>
    %256 = vector.extract_strided_slice %185 {offsets = [112, 0], sizes = [8, 128], strides = [1, 1]} : vector<128x128xf32> to vector<8x128xf32>
    %257 = vector.broadcast %48 : f32 to vector<8x128xf32>
    %258 = arith.addf %256, %257 : vector<8x128xf32>
    %cst_35 = arith.constant 0.000000e+00 : f32
    %259 = vector.broadcast %cst_35 : f32 to vector<8x128xf32>
    %260 = arith.maximumf %258, %259 : vector<8x128xf32>
    %261 = vector.extract_strided_slice %185 {offsets = [120, 0], sizes = [8, 128], strides = [1, 1]} : vector<128x128xf32> to vector<8x128xf32>
    %262 = vector.broadcast %49 : f32 to vector<8x128xf32>
    %263 = arith.addf %261, %262 : vector<8x128xf32>
    %cst_36 = arith.constant 0.000000e+00 : f32
    %264 = vector.broadcast %cst_36 : f32 to vector<8x128xf32>
    %265 = arith.maximumf %263, %264 : vector<8x128xf32>
    %266 = tpu.concatenate %190, %195, %200, %205, %210, %215, %220, %225, %230, %235, %240, %245, %250, %255, %260, %265 in 0 : vector<8x128xf32>, vector<8x128xf32>, vector<8x128xf32>, vector<8x128xf32>, vector<8x128xf32>, vector<8x128xf32>, vector<8x128xf32>, vector<8x128xf32>, vector<8x128xf32>, vector<8x128xf32>, vector<8x128xf32>, vector<8x128xf32>, vector<8x128xf32>, vector<8x128xf32>, vector<8x128xf32>, vector<8x128xf32> -> vector<128x128xf32>
    %267 = arith.truncf %266 : vector<128x128xf32> to vector<128x128xbf16>
    %cst_37 = arith.constant dense<0.000000e+00> : vector<128x128xf32>
    %268 = tpu.matmul %1, %267, %cst_37 {dimension_numbers = #tpu.dot_dimension_numbers<[1], [0], [0], [1], [0, 0, 1, 1], [], []>} : vector<128x128xbf16>, vector<128x128xbf16>, vector<128x128xf32> -> vector<128x128xf32>
    %269 = vector.extract_strided_slice %268 {offsets = [0, 0], sizes = [8, 128], strides = [1, 1]} : vector<128x128xf32> to vector<8x128xf32>
    %270 = vector.broadcast %50 : f32 to vector<8x128xf32>
    %271 = arith.addf %269, %270 : vector<8x128xf32>
    %cst_38 = arith.constant 0.000000e+00 : f32
    %272 = vector.broadcast %cst_38 : f32 to vector<8x128xf32>
    %273 = arith.maximumf %271, %272 : vector<8x128xf32>
    %274 = vector.broadcast %66 : f32 to vector<8x128xf32>
    %275 = arith.mulf %273, %274 : vector<8x128xf32>
    %276 = vector.extract_strided_slice %268 {offsets = [8, 0], sizes = [8, 128], strides = [1, 1]} : vector<128x128xf32> to vector<8x128xf32>
    %277 = vector.broadcast %51 : f32 to vector<8x128xf32>
    %278 = arith.addf %276, %277 : vector<8x128xf32>
    %cst_39 = arith.constant 0.000000e+00 : f32
    %279 = vector.broadcast %cst_39 : f32 to vector<8x128xf32>
    %280 = arith.maximumf %278, %279 : vector<8x128xf32>
    %281 = vector.broadcast %67 : f32 to vector<8x128xf32>
    %282 = arith.mulf %280, %281 : vector<8x128xf32>
    %283 = arith.addf %275, %282 : vector<8x128xf32>
    %284 = vector.extract_strided_slice %268 {offsets = [16, 0], sizes = [8, 128], strides = [1, 1]} : vector<128x128xf32> to vector<8x128xf32>
    %285 = vector.broadcast %52 : f32 to vector<8x128xf32>
    %286 = arith.addf %284, %285 : vector<8x128xf32>
    %cst_40 = arith.constant 0.000000e+00 : f32
    %287 = vector.broadcast %cst_40 : f32 to vector<8x128xf32>
    %288 = arith.maximumf %286, %287 : vector<8x128xf32>
    %289 = vector.broadcast %68 : f32 to vector<8x128xf32>
    %290 = arith.mulf %288, %289 : vector<8x128xf32>
    %291 = arith.addf %283, %290 : vector<8x128xf32>
    %292 = vector.extract_strided_slice %268 {offsets = [24, 0], sizes = [8, 128], strides = [1, 1]} : vector<128x128xf32> to vector<8x128xf32>
    %293 = vector.broadcast %53 : f32 to vector<8x128xf32>
    %294 = arith.addf %292, %293 : vector<8x128xf32>
    %cst_41 = arith.constant 0.000000e+00 : f32
    %295 = vector.broadcast %cst_41 : f32 to vector<8x128xf32>
    %296 = arith.maximumf %294, %295 : vector<8x128xf32>
    %297 = vector.broadcast %69 : f32 to vector<8x128xf32>
    %298 = arith.mulf %296, %297 : vector<8x128xf32>
    %299 = arith.addf %291, %298 : vector<8x128xf32>
    %300 = vector.extract_strided_slice %268 {offsets = [32, 0], sizes = [8, 128], strides = [1, 1]} : vector<128x128xf32> to vector<8x128xf32>
    %301 = vector.broadcast %54 : f32 to vector<8x128xf32>
    %302 = arith.addf %300, %301 : vector<8x128xf32>
    %cst_42 = arith.constant 0.000000e+00 : f32
    %303 = vector.broadcast %cst_42 : f32 to vector<8x128xf32>
    %304 = arith.maximumf %302, %303 : vector<8x128xf32>
    %305 = vector.broadcast %70 : f32 to vector<8x128xf32>
    %306 = arith.mulf %304, %305 : vector<8x128xf32>
    %307 = arith.addf %299, %306 : vector<8x128xf32>
    %308 = vector.extract_strided_slice %268 {offsets = [40, 0], sizes = [8, 128], strides = [1, 1]} : vector<128x128xf32> to vector<8x128xf32>
    %309 = vector.broadcast %55 : f32 to vector<8x128xf32>
    %310 = arith.addf %308, %309 : vector<8x128xf32>
    %cst_43 = arith.constant 0.000000e+00 : f32
    %311 = vector.broadcast %cst_43 : f32 to vector<8x128xf32>
    %312 = arith.maximumf %310, %311 : vector<8x128xf32>
    %313 = vector.broadcast %71 : f32 to vector<8x128xf32>
    %314 = arith.mulf %312, %313 : vector<8x128xf32>
    %315 = arith.addf %307, %314 : vector<8x128xf32>
    %316 = vector.extract_strided_slice %268 {offsets = [48, 0], sizes = [8, 128], strides = [1, 1]} : vector<128x128xf32> to vector<8x128xf32>
    %317 = vector.broadcast %56 : f32 to vector<8x128xf32>
    %318 = arith.addf %316, %317 : vector<8x128xf32>
    %cst_44 = arith.constant 0.000000e+00 : f32
    %319 = vector.broadcast %cst_44 : f32 to vector<8x128xf32>
    %320 = arith.maximumf %318, %319 : vector<8x128xf32>
    %321 = vector.broadcast %72 : f32 to vector<8x128xf32>
    %322 = arith.mulf %320, %321 : vector<8x128xf32>
    %323 = arith.addf %315, %322 : vector<8x128xf32>
    %324 = vector.extract_strided_slice %268 {offsets = [56, 0], sizes = [8, 128], strides = [1, 1]} : vector<128x128xf32> to vector<8x128xf32>
    %325 = vector.broadcast %57 : f32 to vector<8x128xf32>
    %326 = arith.addf %324, %325 : vector<8x128xf32>
    %cst_45 = arith.constant 0.000000e+00 : f32
    %327 = vector.broadcast %cst_45 : f32 to vector<8x128xf32>
    %328 = arith.maximumf %326, %327 : vector<8x128xf32>
    %329 = vector.broadcast %73 : f32 to vector<8x128xf32>
    %330 = arith.mulf %328, %329 : vector<8x128xf32>
    %331 = arith.addf %323, %330 : vector<8x128xf32>
    %332 = vector.extract_strided_slice %268 {offsets = [64, 0], sizes = [8, 128], strides = [1, 1]} : vector<128x128xf32> to vector<8x128xf32>
    %333 = vector.broadcast %58 : f32 to vector<8x128xf32>
    %334 = arith.addf %332, %333 : vector<8x128xf32>
    %cst_46 = arith.constant 0.000000e+00 : f32
    %335 = vector.broadcast %cst_46 : f32 to vector<8x128xf32>
    %336 = arith.maximumf %334, %335 : vector<8x128xf32>
    %337 = vector.broadcast %74 : f32 to vector<8x128xf32>
    %338 = arith.mulf %336, %337 : vector<8x128xf32>
    %339 = arith.addf %331, %338 : vector<8x128xf32>
    %340 = vector.extract_strided_slice %268 {offsets = [72, 0], sizes = [8, 128], strides = [1, 1]} : vector<128x128xf32> to vector<8x128xf32>
    %341 = vector.broadcast %59 : f32 to vector<8x128xf32>
    %342 = arith.addf %340, %341 : vector<8x128xf32>
    %cst_47 = arith.constant 0.000000e+00 : f32
    %343 = vector.broadcast %cst_47 : f32 to vector<8x128xf32>
    %344 = arith.maximumf %342, %343 : vector<8x128xf32>
    %345 = vector.broadcast %75 : f32 to vector<8x128xf32>
    %346 = arith.mulf %344, %345 : vector<8x128xf32>
    %347 = arith.addf %339, %346 : vector<8x128xf32>
    %348 = vector.extract_strided_slice %268 {offsets = [80, 0], sizes = [8, 128], strides = [1, 1]} : vector<128x128xf32> to vector<8x128xf32>
    %349 = vector.broadcast %60 : f32 to vector<8x128xf32>
    %350 = arith.addf %348, %349 : vector<8x128xf32>
    %cst_48 = arith.constant 0.000000e+00 : f32
    %351 = vector.broadcast %cst_48 : f32 to vector<8x128xf32>
    %352 = arith.maximumf %350, %351 : vector<8x128xf32>
    %353 = vector.broadcast %76 : f32 to vector<8x128xf32>
    %354 = arith.mulf %352, %353 : vector<8x128xf32>
    %355 = arith.addf %347, %354 : vector<8x128xf32>
    %356 = vector.extract_strided_slice %268 {offsets = [88, 0], sizes = [8, 128], strides = [1, 1]} : vector<128x128xf32> to vector<8x128xf32>
    %357 = vector.broadcast %61 : f32 to vector<8x128xf32>
    %358 = arith.addf %356, %357 : vector<8x128xf32>
    %cst_49 = arith.constant 0.000000e+00 : f32
    %359 = vector.broadcast %cst_49 : f32 to vector<8x128xf32>
    %360 = arith.maximumf %358, %359 : vector<8x128xf32>
    %361 = vector.broadcast %77 : f32 to vector<8x128xf32>
    %362 = arith.mulf %360, %361 : vector<8x128xf32>
    %363 = arith.addf %355, %362 : vector<8x128xf32>
    %364 = vector.extract_strided_slice %268 {offsets = [96, 0], sizes = [8, 128], strides = [1, 1]} : vector<128x128xf32> to vector<8x128xf32>
    %365 = vector.broadcast %62 : f32 to vector<8x128xf32>
    %366 = arith.addf %364, %365 : vector<8x128xf32>
    %cst_50 = arith.constant 0.000000e+00 : f32
    %367 = vector.broadcast %cst_50 : f32 to vector<8x128xf32>
    %368 = arith.maximumf %366, %367 : vector<8x128xf32>
    %369 = vector.broadcast %78 : f32 to vector<8x128xf32>
    %370 = arith.mulf %368, %369 : vector<8x128xf32>
    %371 = arith.addf %363, %370 : vector<8x128xf32>
    %372 = vector.extract_strided_slice %268 {offsets = [104, 0], sizes = [8, 128], strides = [1, 1]} : vector<128x128xf32> to vector<8x128xf32>
    %373 = vector.broadcast %63 : f32 to vector<8x128xf32>
    %374 = arith.addf %372, %373 : vector<8x128xf32>
    %cst_51 = arith.constant 0.000000e+00 : f32
    %375 = vector.broadcast %cst_51 : f32 to vector<8x128xf32>
    %376 = arith.maximumf %374, %375 : vector<8x128xf32>
    %377 = vector.broadcast %79 : f32 to vector<8x128xf32>
    %378 = arith.mulf %376, %377 : vector<8x128xf32>
    %379 = arith.addf %371, %378 : vector<8x128xf32>
    %380 = vector.extract_strided_slice %268 {offsets = [112, 0], sizes = [8, 128], strides = [1, 1]} : vector<128x128xf32> to vector<8x128xf32>
    %381 = vector.broadcast %64 : f32 to vector<8x128xf32>
    %382 = arith.addf %380, %381 : vector<8x128xf32>
    %cst_52 = arith.constant 0.000000e+00 : f32
    %383 = vector.broadcast %cst_52 : f32 to vector<8x128xf32>
    %384 = arith.maximumf %382, %383 : vector<8x128xf32>
    %385 = vector.broadcast %80 : f32 to vector<8x128xf32>
    %386 = arith.mulf %384, %385 : vector<8x128xf32>
    %387 = arith.addf %379, %386 : vector<8x128xf32>
    %388 = vector.extract_strided_slice %268 {offsets = [120, 0], sizes = [8, 128], strides = [1, 1]} : vector<128x128xf32> to vector<8x128xf32>
    %389 = vector.broadcast %65 : f32 to vector<8x128xf32>
    %390 = arith.addf %388, %389 : vector<8x128xf32>
    %cst_53 = arith.constant 0.000000e+00 : f32
    %391 = vector.broadcast %cst_53 : f32 to vector<8x128xf32>
    %392 = arith.maximumf %390, %391 : vector<8x128xf32>
    %393 = vector.broadcast %81 : f32 to vector<8x128xf32>
    %394 = arith.mulf %392, %393 : vector<8x128xf32>
    %395 = arith.addf %387, %394 : vector<8x128xf32>
    %396 = vector.broadcast %82 : f32 to vector<8x128xf32>
    %397 = arith.addf %395, %396 : vector<8x128xf32>
    %398 = arith.addf %397, %86 : vector<8x128xf32>
    %cst_54 = arith.constant 5.000000e-01 : f32
    %399 = vector.broadcast %cst_54 : f32 to vector<8x128xf32>
    %400 = arith.mulf %399, %398 : vector<8x128xf32>
    %401 = math.tanh %400 : vector<8x128xf32>
    %cst_55 = arith.constant 5.000000e-01 : f32
    %402 = vector.broadcast %cst_55 : f32 to vector<8x128xf32>
    %403 = arith.mulf %402, %401 : vector<8x128xf32>
    %cst_56 = arith.constant 5.000000e-01 : f32
    %404 = vector.broadcast %cst_56 : f32 to vector<8x128xf32>
    %405 = arith.addf %403, %404 : vector<8x128xf32>
    %406 = arith.index_cast %84 : i32 to index
    %c0_57 = arith.constant 0 : index
    %407 = vector.load %arg5[%406, %c0_57] : memref<8x128xf32, #tpu.memory_space<vmem>>, vector<8x128xf32>
    tpu.vector_store %arg5[%406, %c0_57], %405 {strides = array<i32>} : memref<8x128xf32, #tpu.memory_space<vmem>>, vector<8x128xf32>,
    %c1_i32 = arith.constant 1 : i32
    return
  }
  func.func @transform_0(%arg0: i32) -> (i32, i32) {
    %c0_i32 = arith.constant 0 : i32
    %c0_i32_0 = arith.constant 0 : i32
    return %arg0, %c0_i32 : i32, i32
  }
  func.func @transform_1(%arg0: i32) -> (i32, i32) {
    %c0_i32 = arith.constant 0 : i32
    %c0_i32_0 = arith.constant 0 : i32
    %c0_i32_1 = arith.constant 0 : i32
    return %c0_i32, %c0_i32_0 : i32, i32
  }
  func.func @transform_2(%arg0: i32) -> (i32, i32) {
    %c0_i32 = arith.constant 0 : i32
    %c0_i32_0 = arith.constant 0 : i32
    %c0_i32_1 = arith.constant 0 : i32
    return %c0_i32, %c0_i32_0 : i32, i32
  }
  func.func @transform_3(%arg0: i32) -> i32 {
    %c0_i32 = arith.constant 0 : i32
    %c0_i32_0 = arith.constant 0 : i32
    return %c0_i32 : i32
  }
  func.func @transform_4(%arg0: i32) -> (i32, i32) {
    %c0_i32 = arith.constant 0 : i32
    %c0_i32_0 = arith.constant 0 : i32
    return %arg0, %c0_i32 : i32, i32
  }
}

</mosaic_0001>

<llo_original>
// kernel: tpu_custom_call.1
$region0: #{tpu_custom_call.1}
  #allocation0 [shape = 'u32[]', space=smem, size = 0x4, offset = 0x4, fixed_abs, tag = 'smem constant byte address 0x4 - core index']
  #allocation1 [shape = 'u32[144,128]{1,0:T(1,128)}', space=vmem, size = 0x12000, scoped, tag = 'internal scratch']
  %s0 = inlined_call_operand.hbm [shape: f32[16,128], index: 0, kind: input, shape index: {}]
  %s1 = inlined_call_operand.hbm [shape: bf16[128,128], index: 1, kind: input, shape index: {}]
  %s2 = inlined_call_operand.hbm [shape: bf16[128,128], index: 2, kind: input, shape index: {}]
  %s3 = inlined_call_operand.vmem [shape: f32[81], index: 3, kind: input, shape index: {}]
  %s4 = inlined_call_operand.hbm [shape: f32[16,128], index: 4, kind: output, shape index: {}]
  %s5 = sld [smem:[#allocation0]]
  $region65: #{tpu_custom_call.1} parent=0
    _
  %s7 = ssub.s32 1, %s5
  %s8 = scalar_select 0, %s7, %s5
  $region1: #{tpu_custom_call.1} parent=0
    #allocation2 [shape = 'u8[8192]{0}', space=vmem, size = 0x2000, scoped, tag = 'input window, operand 0']
    #allocation3 [shape = 's32[2]{0}', space=sflag, size = 0x8, scoped, tag = 'scoped memory for tpu_custom_call.1']
    #allocation4 [shape = 's32[2]{0}', space=sflag, size = 0x8, scoped, tag = 'scoped memory for tpu_custom_call.1']
    #allocation5 [shape = 's32[2]{0}', space=sflag, size = 0x8, scoped, tag = 'scoped memory for tpu_custom_call.1']
    #allocation6 [shape = 'u8[32768]{0}', space=vmem, size = 0x8000, scoped, tag = 'input window, operand 1, single buffered']
    #allocation7 [shape = 's32[1]{0}', space=sflag, size = 0x4, scoped, tag = 'scoped memory for tpu_custom_call.1']
    #allocation8 [shape = 'u8[32768]{0}', space=vmem, size = 0x8000, scoped, tag = 'input window, operand 2, single buffered']
    #allocation9 [shape = 'u8[512]{0}', space=smem, size = 0x200, scoped, tag = 'input window, operand 3, single buffered']
    #allocation10 [shape = 'u8[8192]{0}', space=vmem, size = 0x2000, scoped, tag = 'output window, operand 0']
    %9 = vsyncpa [#allocation3], 0
    %s10 = scalar_lea.sflag [#allocation3], 1
    %11 = vsyncpa %s10, 0
    %12 = vsyncpa [#allocation7], 0
    %13 = vsyncpa [#allocation5], 0
    %14 = vsyncpa [#allocation4], 0
    %s15 = scalar_lea.sflag [#allocation4], 1
    %16 = vsyncpa %s15, 0
    loop: start=0, step=1, limit=4
    $region2: #{tpu_custom_call.1} parent=1 // loop_pre_header
      _
    $region3: #{tpu_custom_call.1} parent=1 // loop_header
      %s18 = sphi 0, %s22
      %p19 = scmp.ge.s32.totalorder %s18, 4
      %s28 = sphi 0, %s30
      %s31 = sphi 0, %s28
      %s32 = sphi 0, %s31
      %s48 = sphi 0, %s32
      %s52 = sphi 0, %s52
      %s54 = sphi 0, %s52
      %s55 = sphi 0, %s54
      %s69 = sphi 0, %s55
      %s73 = sphi 0, %s73
      %s75 = sphi 0, %s73
      %s76 = sphi 0, %s75
      %s90 = sphi 0, %s76
      %s94 = sphi 0, %s94
      %s96 = sphi 0, %s94
      %s97 = sphi 0, %s96
      %s111 = sphi 0, %s97
      %s117 = sphi 0, %s119
      %s120 = sphi 0, %s117
      %s121 = sphi 0, %s120
      %s137 = sphi 0, %s121
    $region4: #{tpu_custom_call.1} parent=1 // loop_header_branch
      %21 = sbr.rel (%p19) target = $region8
    $region5: #{tpu_custom_call.1} parent=1 // loop_body
      %s23 = ssub.s32 %s18, 1
      %s24 = ssub.s32 %s18, 2
      %s25 = sadd.s32 %s18, 1
      %s26 = ssub.s32 %s18, %s25
      %p27 = scmp.eq.s32.totalorder %s26, 0
      %s29 = sadd.s32 %s28, 1
      %s30 = scalar_select %p27, %s28, %s29
      %p33 = pneg %p27
      %p34 = scmp.eq.s32.totalorder %s18, 1
      %p35 = por %p33, %p34
      %p36 = scmp.ne.s32.totalorder %s28, %s31
      %p37 = scmp.eq.s32.totalorder %s18, 0
      %p38 = por %p36, %p37
      %p39 = scmp.ne.s32.totalorder %s28, %s31
      %p40 = scmp.eq.s32.totalorder %s23, 1
      %p41 = por %p39, %p40
      %p42 = scmp.ne.s32.totalorder %s31, %s32
      %p43 = scmp.eq.s32.totalorder %s23, 0
      %p44 = por %p42, %p43
      %p45 = scmp.ne.s32.totalorder %s31, %s32
      %p46 = scmp.eq.s32.totalorder %s24, 1
      %p47 = por %p45, %p46
      %p49 = scmp.ne.s32.totalorder %s32, %s48
      %p50 = scmp.eq.s32.totalorder %s24, 0
      %p51 = por %p49, %p50
      %s53 = sadd.s32 %s52, 1
      %p56 = scmp.eq.s32.totalorder %s18, 1
      %p57 = scmp.ne.s32.totalorder %s52, %s54
      %p58 = scmp.eq.s32.totalorder %s18, 0
      %p59 = por %p57, %p58
      %p60 = scmp.ne.s32.totalorder %s52, %s54
      %p61 = scmp.eq.s32.totalorder %s23, 1
      %p62 = por %p60, %p61
      %p63 = scmp.ne.s32.totalorder %s54, %s55
      %p64 = scmp.eq.s32.totalorder %s23, 0
      %p65 = por %p63, %p64
      %p66 = scmp.ne.s32.totalorder %s54, %s55
      %p67 = scmp.eq.s32.totalorder %s24, 1
      %p68 = por %p66, %p67
      %p70 = scmp.ne.s32.totalorder %s55, %s69
      %p71 = scmp.eq.s32.totalorder %s24, 0
      %p72 = por %p70, %p71
      %s74 = sadd.s32 %s73, 1
      %p77 = scmp.eq.s32.totalorder %s18, 1
      %p78 = scmp.ne.s32.totalorder %s73, %s75
      %p79 = scmp.eq.s32.totalorder %s18, 0
      %p80 = por %p78, %p79
      %p81 = scmp.ne.s32.totalorder %s73, %s75
      %p82 = scmp.eq.s32.totalorder %s23, 1
      %p83 = por %p81, %p82
      %p84 = scmp.ne.s32.totalorder %s75, %s76
      %p85 = scmp.eq.s32.totalorder %s23, 0
      %p86 = por %p84, %p85
      %p87 = scmp.ne.s32.totalorder %s75, %s76
      %p88 = scmp.eq.s32.totalorder %s24, 1
      %p89 = por %p87, %p88
      %p91 = scmp.ne.s32.totalorder %s76, %s90
      %p92 = scmp.eq.s32.totalorder %s24, 0
      %p93 = por %p91, %p92
      %s95 = sadd.s32 %s94, 1
      %p98 = scmp.eq.s32.totalorder %s18, 1
      %p99 = scmp.ne.s32.totalorder %s94, %s96
      %p100 = scmp.eq.s32.totalorder %s18, 0
      %p101 = por %p99, %p100
      %p102 = scmp.ne.s32.totalorder %s94, %s96
      %p103 = scmp.eq.s32.totalorder %s23, 1
      %p104 = por %p102, %p103
      %p105 = scmp.ne.s32.totalorder %s96, %s97
      %p106 = scmp.eq.s32.totalorder %s23, 0
      %p107 = por %p105, %p106
      %p108 = scmp.ne.s32.totalorder %s96, %s97
      %p109 = scmp.eq.s32.totalorder %s24, 1
      %p110 = por %p108, %p109
      %p112 = scmp.ne.s32.totalorder %s97, %s111
      %p113 = scmp.eq.s32.totalorder %s24, 0
      %p114 = por %p112, %p113
      %s115 = ssub.s32 %s18, %s25
      %p116 = scmp.eq.s32.totalorder %s115, 0
      %s118 = sadd.s32 %s117, 1
      %s119 = scalar_select %p116, %s117, %s118
      %p122 = pneg %p116
      %p123 = scmp.eq.s32.totalorder %s18, 1
      %p124 = por %p122, %p123
      %p125 = scmp.ne.s32.totalorder %s117, %s120
      %p126 = scmp.eq.s32.totalorder %s18, 0
      %p127 = por %p125, %p126
      %p128 = scmp.ne.s32.totalorder %s117, %s120
      %p129 = scmp.eq.s32.totalorder %s23, 1
      %p130 = por %p128, %p129
      %p131 = scmp.ne.s32.totalorder %s120, %s121
      %p132 = scmp.eq.s32.totalorder %s23, 0
      %p133 = por %p131, %p132
      %p134 = scmp.ne.s32.totalorder %s120, %s121
      %p135 = scmp.eq.s32.totalorder %s24, 1
      %p136 = por %p134, %p135
      %p138 = scmp.ne.s32.totalorder %s121, %s137
      %p139 = scmp.eq.s32.totalorder %s24, 0
      %p140 = por %p138, %p139
      %p141 = scmp.le.s32.totalorder 1, %s18
      %p142 = scmp.lt.s32.totalorder %s18, 3
      %p143 = pnand %p141, %p142
      %p144 = pneg %p143
      // Predicated region
      $region9: #{tpu_custom_call.1} parent=5 // pred_check
        _
      $region10: #{tpu_custom_call.1} parent=5 // pred_check_branch
        %146 = sbr.rel (%p143) target = $region12
      $region11: #{tpu_custom_call.1} parent=5 // pred_region
        %s147 = ssub.s32 %s18, 1
        // Predicated region
        $region13: #{tpu_custom_call.1} parent=11 // pred_check
          %p148 = pneg %p65
        $region14: #{tpu_custom_call.1} parent=11 // pred_check_branch
          %150 = sbr.rel (%p148) target = $region16
        $region15: #{tpu_custom_call.1} parent=11 // pred_region
          %s152 = ssub.s32 1024, 1024
          %153 = vsyncadd [#allocation7], %s152
          %s154 = sshll.u32 [#allocation6], 4
          %s155 = int_to_ptr.vmem [resolvable:$true] %s154
          %160 = dma.hbm_to_vmem [thread:$0]  %s1, 1024, %s155, [#allocation7], 64, 64, 4
        $region16: #{tpu_custom_call.1} parent=11 // pred_fallthru
          _
        // Predicated region
        $region17: #{tpu_custom_call.1} parent=11 // pred_check
          %p161 = pneg %p86
        $region18: #{tpu_custom_call.1} parent=11 // pred_check_branch
          %163 = sbr.rel (%p161) target = $region20
        $region19: #{tpu_custom_call.1} parent=11 // pred_region
          %s165 = ssub.s32 1024, 1024
          %166 = vsyncadd [#allocation7], %s165
          %s167 = sshll.u32 [#allocation8], 4
          %s168 = int_to_ptr.vmem [resolvable:$true] %s167
          %173 = dma.hbm_to_vmem [thread:$0]  %s2, 1024, %s168, [#allocation7], 64, 64, 4
        $region20: #{tpu_custom_call.1} parent=11 // pred_fallthru
          _
        // Predicated region
        $region21: #{tpu_custom_call.1} parent=11 // pred_check
          %p174 = pneg %p107
        $region22: #{tpu_custom_call.1} parent=11 // pred_check_branch
          %176 = sbr.rel (%p174) target = $region24
        $region23: #{tpu_custom_call.1} parent=11 // pred_region
          %s178 = ssub.s32 16, 16
          %179 = vsyncadd [#allocation5], %s178
          %s181 = sshll.u32 %s3, 4
          %s182 = int_to_ptr.vmem [resolvable:$true] %s181
          %184 = dma.vmem_to_smem %s182, 16, [#allocation9], [#allocation5]
        $region24: #{tpu_custom_call.1} parent=11 // pred_fallthru
          _
      $region12: #{tpu_custom_call.1} parent=5 // pred_fallthru
        _
      %p185 = scmp.lt.s32.totalorder %s18, 2
      // Predicated region
      $region25: #{tpu_custom_call.1} parent=5 // pred_check
        %p186 = pneg %p185
      $region26: #{tpu_custom_call.1} parent=5 // pred_check_branch
        %188 = sbr.rel (%p186) target = $region28
      $region27: #{tpu_custom_call.1} parent=5 // pred_region
        // Predicated region
        $region29: #{tpu_custom_call.1} parent=27 // pred_check
          %p189 = pneg %p38
        $region30: #{tpu_custom_call.1} parent=27 // pred_check_branch
          %191 = sbr.rel (%p189) target = $region32
        $region31: #{tpu_custom_call.1} parent=27 // pred_region
          %s192 = sand.u32 %s28, 1
          %s193 = scalar_lea.sflag [#allocation3], %s192
          %s194 = sand.u32 %s28, 1
          %s195 = smul.addr %s194, 8
          %s196 = scalar_lea.vmem [#allocation2], %s195
          %s198 = ssub.s32 128, 128
          %199 = vsyncadd %s193, %s198
          %s200 = smul.addr %s18, 128
          %s201 = scalar_lea.hbm %s0, %s200
          %s203 = sshll.u32 %s196, 4
          %s204 = int_to_ptr.vmem [resolvable:$true] %s203
          %206 = dma.hbm_to_vmem [thread:$0]  %s201, 128, %s204, %s193
        $region32: #{tpu_custom_call.1} parent=27 // pred_fallthru
          _
      $region28: #{tpu_custom_call.1} parent=5 // pred_fallthru
        _
      %p207 = scmp.le.s32.totalorder 1, %s18
      %p208 = scmp.lt.s32.totalorder %s18, 3
      %p209 = pnand %p207, %p208
      %p210 = pneg %p209
      // Predicated region
      $region33: #{tpu_custom_call.1} parent=5 // pred_check
        _
      $region34: #{tpu_custom_call.1} parent=5 // pred_check_branch
        %212 = sbr.rel (%p209) target = $region36
      $region35: #{tpu_custom_call.1} parent=5 // pred_region
        %s213 = ssub.s32 %s18, 1
        %s214 = sand.u32 %s31, 1
        %s215 = scalar_lea.sflag [#allocation3], %s214
        %s216 = sand.u32 %s31, 1
        %s217 = smul.addr %s216, 8
        %s218 = scalar_lea.vmem [#allocation2], %s217
        // Predicated region
        $region37: #{tpu_custom_call.1} parent=35 // pred_check
          %p219 = pneg %p44
        $region38: #{tpu_custom_call.1} parent=35 // pred_check_branch
          %221 = sbr.rel (%p219) target = $region40
        $region39: #{tpu_custom_call.1} parent=35 // pred_region
          %222 = dma.done %s215, 128
        $region40: #{tpu_custom_call.1} parent=35 // pred_fallthru
          _
        // Predicated region
        $region41: #{tpu_custom_call.1} parent=35 // pred_check
          %p223 = pneg %p65
        $region42: #{tpu_custom_call.1} parent=35 // pred_check_branch
          %225 = sbr.rel (%p223) target = $region44
        $region43: #{tpu_custom_call.1} parent=35 // pred_region
          %226 = dma.done [#allocation7], 1024
        $region44: #{tpu_custom_call.1} parent=35 // pred_fallthru
          _
        // Predicated region
        $region45: #{tpu_custom_call.1} parent=35 // pred_check
          %p227 = pneg %p86
        $region46: #{tpu_custom_call.1} parent=35 // pred_check_branch
          %229 = sbr.rel (%p227) target = $region48
        $region47: #{tpu_custom_call.1} parent=35 // pred_region
          %230 = dma.done [#allocation7], 1024
        $region48: #{tpu_custom_call.1} parent=35 // pred_fallthru
          _
        // Predicated region
        $region49: #{tpu_custom_call.1} parent=35 // pred_check
          %p231 = pneg %p107
        $region50: #{tpu_custom_call.1} parent=35 // pred_check_branch
          %233 = sbr.rel (%p231) target = $region52
        $region51: #{tpu_custom_call.1} parent=35 // pred_region
          %234 = dma.done [#allocation5], 16
        $region52: #{tpu_custom_call.1} parent=35 // pred_fallthru
          _
        %235 = sfence
        %s236 = sand.u32 %s31, 1
        %s237 = scalar_lea.sflag [#allocation3], %s236
        %s238 = sand.u32 %s31, 1
        %s239 = smul.addr %s238, 8
        %s240 = scalar_lea.vmem [#allocation2], %s239
        %p241 = pneg %p44
        %p242 = pneg %p41
        %p243 = pneg %p65
        %p244 = pneg %p62
        %p245 = pneg %p86
        %p246 = pneg %p83
        %p247 = pneg %p107
        %p248 = pneg %p104
        %p249 = pneg %p133
        %p250 = pneg %p130
        %s251 = sand.u32 %s120, 1
        %s252 = scalar_lea.sflag [#allocation4], %s251
        %s253 = sand.u32 %s120, 1
        %s254 = smul.addr %s253, 8
        %s255 = scalar_lea.vmem [#allocation10], %s254
        %v257 = vld [vmem:[#allocation6] sm:$0xf]
        %v258 = vld [vmem:[#allocation6 + $0x4] sm:$0xf]
        %v259 = vld [vmem:[#allocation6 + $0x8] sm:$0xf]
        %v260 = vld [vmem:[#allocation6 + $0xc] sm:$0xf]
        %v261 = vld [vmem:[#allocation6 + $0x10] sm:$0xf]
        %v262 = vld [vmem:[#allocation6 + $0x14] sm:$0xf]
        %v263 = vld [vmem:[#allocation6 + $0x18] sm:$0xf]
        %v264 = vld [vmem:[#allocation6 + $0x1c] sm:$0xf]
        %v265 = vld [vmem:[#allocation6 + $0x20] sm:$0xf]
        %v266 = vld [vmem:[#allocation6 + $0x24] sm:$0xf]
        %v267 = vld [vmem:[#allocation6 + $0x28] sm:$0xf]
        %v268 = vld [vmem:[#allocation6 + $0x2c] sm:$0xf]
        %v269 = vld [vmem:[#allocation6 + $0x30] sm:$0xf]
        %v270 = vld [vmem:[#allocation6 + $0x34] sm:$0xf]
        %v271 = vld [vmem:[#allocation6 + $0x38] sm:$0xf]
        %v272 = vld [vmem:[#allocation6 + $0x3c] sm:$0xf]
        %v273 = vld [vmem:[#allocation8] sm:$0xf]
        %v274 = vld [vmem:[#allocation8 + $0x4] sm:$0xf]
        %v275 = vld [vmem:[#allocation8 + $0x8] sm:$0xf]
        %v276 = vld [vmem:[#allocation8 + $0xc] sm:$0xf]
        %v277 = vld [vmem:[#allocation8 + $0x10] sm:$0xf]
        %v278 = vld [vmem:[#allocation8 + $0x14] sm:$0xf]
        %v279 = vld [vmem:[#allocation8 + $0x18] sm:$0xf]
        %v280 = vld [vmem:[#allocation8 + $0x1c] sm:$0xf]
        %v281 = vld [vmem:[#allocation8 + $0x20] sm:$0xf]
        %v282 = vld [vmem:[#allocation8 + $0x24] sm:$0xf]
        %v283 = vld [vmem:[#allocation8 + $0x28] sm:$0xf]
        %v284 = vld [vmem:[#allocation8 + $0x2c] sm:$0xf]
        %v285 = vld [vmem:[#allocation8 + $0x30] sm:$0xf]
        %v286 = vld [vmem:[#allocation8 + $0x34] sm:$0xf]
        %v287 = vld [vmem:[#allocation8 + $0x38] sm:$0xf]
        %v288 = vld [vmem:[#allocation8 + $0x3c] sm:$0xf]
        %s289 = sld [smem:[#allocation9]]
        %s290 = sld [smem:[#allocation9 + $0x1]]
        %s291 = sld [smem:[#allocation9 + $0x2]]
        %s292 = sld [smem:[#allocation9 + $0x3]]
        %s293 = sld [smem:[#allocation9 + $0x4]]
        %s294 = sld [smem:[#allocation9 + $0x5]]
        %s295 = sld [smem:[#allocation9 + $0x6]]
        %s296 = sld [smem:[#allocation9 + $0x7]]
        %s297 = sld [smem:[#allocation9 + $0x8]]
        %s298 = sld [smem:[#allocation9 + $0x9]]
        %s299 = sld [smem:[#allocation9 + $0xa]]
        %s300 = sld [smem:[#allocation9 + $0xb]]
        %s301 = sld [smem:[#allocation9 + $0xc]]
        %s302 = sld [smem:[#allocation9 + $0xd]]
        %s303 = sld [smem:[#allocation9 + $0xe]]
        %s304 = sld [smem:[#allocation9 + $0xf]]
        %s305 = sld [smem:[#allocation9 + $0x10]]
        %s306 = sld [smem:[#allocation9 + $0x11]]
        %s307 = sld [smem:[#allocation9 + $0x12]]
        %s308 = sld [smem:[#allocation9 + $0x13]]
        %s309 = sld [smem:[#allocation9 + $0x14]]
        %s310 = sld [smem:[#allocation9 + $0x15]]
        %s311 = sld [smem:[#allocation9 + $0x16]]
        %s312 = sld [smem:[#allocation9 + $0x17]]
        %s313 = sld [smem:[#allocation9 + $0x18]]
        %s314 = sld [smem:[#allocation9 + $0x19]]
        %s315 = sld [smem:[#allocation9 + $0x1a]]
        %s316 = sld [smem:[#allocation9 + $0x1b]]
        %s317 = sld [smem:[#allocation9 + $0x1c]]
        %s318 = sld [smem:[#allocation9 + $0x1d]]
        %s319 = sld [smem:[#allocation9 + $0x1e]]
        %s320 = sld [smem:[#allocation9 + $0x1f]]
        %s321 = sld [smem:[#allocation9 + $0x20]]
        %s322 = sld [smem:[#allocation9 + $0x21]]
        %s323 = sld [smem:[#allocation9 + $0x22]]
        %s324 = sld [smem:[#allocation9 + $0x23]]
        %s325 = sld [smem:[#allocation9 + $0x24]]
        %s326 = sld [smem:[#allocation9 + $0x25]]
        %s327 = sld [smem:[#allocation9 + $0x26]]
        %s328 = sld [smem:[#allocation9 + $0x27]]
        %s329 = sld [smem:[#allocation9 + $0x28]]
        %s330 = sld [smem:[#allocation9 + $0x29]]
        %s331 = sld [smem:[#allocation9 + $0x2a]]
        %s332 = sld [smem:[#allocation9 + $0x2b]]
        %s333 = sld [smem:[#allocation9 + $0x2c]]
        %s334 = sld [smem:[#allocation9 + $0x2d]]
        %s335 = sld [smem:[#allocation9 + $0x2e]]
        %s336 = sld [smem:[#allocation9 + $0x2f]]
        %s337 = sld [smem:[#allocation9 + $0x30]]
        %s338 = sld [smem:[#allocation9 + $0x31]]
        %s339 = sld [smem:[#allocation9 + $0x32]]
        %s340 = sld [smem:[#allocation9 + $0x33]]
        %s341 = sld [smem:[#allocation9 + $0x34]]
        %s342 = sld [smem:[#allocation9 + $0x35]]
        %s343 = sld [smem:[#allocation9 + $0x36]]
        %s344 = sld [smem:[#allocation9 + $0x37]]
        %s345 = sld [smem:[#allocation9 + $0x38]]
        %s346 = sld [smem:[#allocation9 + $0x39]]
        %s347 = sld [smem:[#allocation9 + $0x3a]]
        %s348 = sld [smem:[#allocation9 + $0x3b]]
        %s349 = sld [smem:[#allocation9 + $0x3c]]
        %s350 = sld [smem:[#allocation9 + $0x3d]]
        %s351 = sld [smem:[#allocation9 + $0x3e]]
        %s352 = sld [smem:[#allocation9 + $0x3f]]
        %s353 = sld [smem:[#allocation9 + $0x40]]
        %s354 = sld [smem:[#allocation9 + $0x41]]
        %s355 = sld [smem:[#allocation9 + $0x42]]
        %s356 = sld [smem:[#allocation9 + $0x43]]
        %s357 = sld [smem:[#allocation9 + $0x44]]
        %s358 = sld [smem:[#allocation9 + $0x45]]
        %s359 = sld [smem:[#allocation9 + $0x46]]
        %s360 = sld [smem:[#allocation9 + $0x47]]
        %s361 = sld [smem:[#allocation9 + $0x48]]
        %s362 = sld [smem:[#allocation9 + $0x49]]
        %s363 = sld [smem:[#allocation9 + $0x4a]]
        %s364 = sld [smem:[#allocation9 + $0x4b]]
        %s365 = sld [smem:[#allocation9 + $0x4c]]
        %s366 = sld [smem:[#allocation9 + $0x4d]]
        %s367 = sld [smem:[#allocation9 + $0x4e]]
        %s368 = sld [smem:[#allocation9 + $0x4f]]
        %s369 = sld [smem:[#allocation9 + $0x50]]
        %v370 = vld [vmem:[%s218] sm:$0xff]
        %v371 = vstv %s289
        %v372 = vmul.f32 %v371, %v370
        %v373 = vstv %s305
        %v374 = vadd.f32 %v372, %v373
        %v375 = vmax.f32 %v374, 0.0
        %v376 = vstv %s290
        %v377 = vmul.f32 %v376, %v370
        %v378 = vstv %s306
        %v379 = vadd.f32 %v377, %v378
        %v380 = vmax.f32 %v379, 0.0
        %v381 = vstv %s291
        %v382 = vmul.f32 %v381, %v370
        %v383 = vstv %s307
        %v384 = vadd.f32 %v382, %v383
        %v385 = vmax.f32 %v384, 0.0
        %v386 = vstv %s292
        %v387 = vmul.f32 %v386, %v370
        %v388 = vstv %s308
        %v389 = vadd.f32 %v387, %v388
        %v390 = vmax.f32 %v389, 0.0
        %v391 = vstv %s293
        %v392 = vmul.f32 %v391, %v370
        %v393 = vstv %s309
        %v394 = vadd.f32 %v392, %v393
        %v395 = vmax.f32 %v394, 0.0
        %v396 = vstv %s294
        %v397 = vmul.f32 %v396, %v370
        %v398 = vstv %s310
        %v399 = vadd.f32 %v397, %v398
        %v400 = vmax.f32 %v399, 0.0
        %v401 = vstv %s295
        %v402 = vmul.f32 %v401, %v370
        %v403 = vstv %s311
        %v404 = vadd.f32 %v402, %v403
        %v405 = vmax.f32 %v404, 0.0
        %v406 = vstv %s296
        %v407 = vmul.f32 %v406, %v370
        %v408 = vstv %s312
        %v409 = vadd.f32 %v407, %v408
        %v410 = vmax.f32 %v409, 0.0
        %v411 = vstv %s297
        %v412 = vmul.f32 %v411, %v370
        %v413 = vstv %s313
        %v414 = vadd.f32 %v412, %v413
        %v415 = vmax.f32 %v414, 0.0
        %v416 = vstv %s298
        %v417 = vmul.f32 %v416, %v370
        %v418 = vstv %s314
        %v419 = vadd.f32 %v417, %v418
        %v420 = vmax.f32 %v419, 0.0
        %v421 = vstv %s299
        %v422 = vmul.f32 %v421, %v370
        %v423 = vstv %s315
        %v424 = vadd.f32 %v422, %v423
        %v425 = vmax.f32 %v424, 0.0
        %v426 = vstv %s300
        %v427 = vmul.f32 %v426, %v370
        %v428 = vstv %s316
        %v429 = vadd.f32 %v427, %v428
        %v430 = vmax.f32 %v429, 0.0
        %v431 = vstv %s301
        %v432 = vmul.f32 %v431, %v370
        %v433 = vstv %s317
        %v434 = vadd.f32 %v432, %v433
        %v435 = vmax.f32 %v434, 0.0
        %v436 = vstv %s302
        %v437 = vmul.f32 %v436, %v370
        %v438 = vstv %s318
        %v439 = vadd.f32 %v437, %v438
        %v440 = vmax.f32 %v439, 0.0
        %v441 = vstv %s303
        %v442 = vmul.f32 %v441, %v370
        %v443 = vstv %s319
        %v444 = vadd.f32 %v442, %v443
        %v445 = vmax.f32 %v444, 0.0
        %v446 = vstv %s304
        %v447 = vmul.f32 %v446, %v370
        %v448 = vstv %s320
        %v449 = vadd.f32 %v447, %v448
        %v450 = vmax.f32 %v449, 0.0
        %v451 = vpack.c.bf16 %v380, %v375
        %v452 = vpack.c.bf16 %v390, %v385
        %v453 = vpack.c.bf16 %v400, %v395
        %v454 = vpack.c.bf16 %v410, %v405
        %v455 = vpack.c.bf16 %v420, %v415
        %v456 = vpack.c.bf16 %v430, %v425
        %v457 = vpack.c.bf16 %v440, %v435
        %v458 = vpack.c.bf16 %v450, %v445
        %v475 = vunpack.c.l.b16 %v257
        %v476 = vunpack.c.l.b16 %v258
        %v477 = vunpack.c.l.b16 %v259
        %v478 = vunpack.c.l.b16 %v260
        %v479 = vunpack.c.l.b16 %v261
        %v480 = vunpack.c.l.b16 %v262
        %v481 = vunpack.c.l.b16 %v263
        %v482 = vunpack.c.l.b16 %v264
        %v483 = vunpack.c.l.b16 %v265
        %v484 = vunpack.c.l.b16 %v266
        %v485 = vunpack.c.l.b16 %v267
        %v486 = vunpack.c.l.b16 %v268
        %v487 = vunpack.c.l.b16 %v269
        %v488 = vunpack.c.l.b16 %v270
        %v489 = vunpack.c.l.b16 %v271
        %v490 = vunpack.c.l.b16 %v272
        %v491 = vpack.c.b16 %v476, %v475
        %v492 = vpack.c.b16 %v478, %v477
        %v493 = vpack.c.b16 %v480, %v479
        %v494 = vpack.c.b16 %v482, %v481
        %v495 = vpack.c.b16 %v484, %v483
        %v496 = vpack.c.b16 %v486, %v485
        %v497 = vpack.c.b16 %v488, %v487
        %v498 = vpack.c.b16 %v490, %v489
        %507 = vmatprep.subr.bf16.mxu0 0
        %508 = vmatpush1.bf16.msra.mxu0 %v458
        %509 = vmatprep.subr.bf16.mxu0 0
        %510 = vmatpush1.bf16.msra.mxu0 %v457
        %511 = vmatprep.subr.bf16.mxu0 0
        %512 = vmatpush1.bf16.msra.mxu0 %v456
        %513 = vmatprep.subr.bf16.mxu0 0
        %514 = vmatpush1.bf16.msra.mxu0 %v455
        %515 = vmatprep.subr.bf16.mxu0 0
        %516 = vmatpush1.bf16.msra.mxu0 %v454
        %517 = vmatprep.subr.bf16.mxu0 0
        %518 = vmatpush1.bf16.msra.mxu0 %v453
        %519 = vmatprep.subr.bf16.mxu0 0
        %520 = vmatpush1.bf16.msra.mxu0 %v452
        %521 = vmatprep.subr.bf16.mxu0 0
        %522 = vmatpush1.bf16.msra.mxu0 %v451
        %523 = vmatprep.subr.bf16.mxu0 0
        %524 = vmatpush2.bf16.msra.mxu0 0
        %525 = vmatprep.subr.bf16.mxu0 0
        %526 = vmatpush2.bf16.msra.mxu0 0
        %527 = vmatprep.subr.bf16.mxu0 0
        %528 = vmatpush2.bf16.msra.mxu0 0
        %529 = vmatprep.subr.bf16.mxu0 0
        %530 = vmatpush2.bf16.msra.mxu0 0
        %531 = vmatprep.subr.bf16.mxu0 0
        %532 = vmatpush2.bf16.msra.mxu0 0
        %533 = vmatprep.subr.bf16.mxu0 0
        %534 = vmatpush2.bf16.msra.mxu0 0
        %535 = vmatprep.subr.bf16.mxu0 0
        %536 = vmatpush2.bf16.msra.mxu0 0
        %537 = vmatprep.subr.bf16.mxu0 0
        %538 = vmatpush2.bf16.msra.mxu0 0
        %539 = vmatprep.mubr.bf16.mxu0 0
        %540 = vmatmul.mubr.bf16.gmra.mxu0 %v491
        %v541 = vpop.f32.mrf.mxu0
        %v542 = vadd.f32 0.0, %v541
        %v543 = vpop.f32.mrf.mxu0
        %v544 = vpop.f32.mrf.mxu0
        %v545 = vadd.f32 0.0, %v544
        %v546 = vpop.f32.mrf.mxu0
        %547 = vmatprep.mubr.bf16.mxu0 0
        %548 = vmatmul.mubr.bf16.gmra.mxu0 %v492
        %v549 = vpop.f32.mrf.mxu0
        %v550 = vadd.f32 0.0, %v549
        %v551 = vpop.f32.mrf.mxu0
        %v552 = vpop.f32.mrf.mxu0
        %v553 = vadd.f32 0.0, %v552
        %v554 = vpop.f32.mrf.mxu0
        %555 = vmatprep.mubr.bf16.mxu0 0
        %556 = vmatmul.mubr.bf16.gmra.mxu0 %v493
        %v557 = vpop.f32.mrf.mxu0
        %v558 = vadd.f32 0.0, %v557
        %v559 = vpop.f32.mrf.mxu0
        %v560 = vpop.f32.mrf.mxu0
        %v561 = vadd.f32 0.0, %v560
        %v562 = vpop.f32.mrf.mxu0
        %563 = vmatprep.mubr.bf16.mxu0 0
        %564 = vmatmul.mubr.bf16.gmra.mxu0 %v494
        %v565 = vpop.f32.mrf.mxu0
        %v566 = vadd.f32 0.0, %v565
        %v567 = vpop.f32.mrf.mxu0
        %v568 = vpop.f32.mrf.mxu0
        %v569 = vadd.f32 0.0, %v568
        %v570 = vpop.f32.mrf.mxu0
        %571 = vmatprep.mubr.bf16.mxu0 0
        %572 = vmatmul.mubr.bf16.gmra.mxu0 %v495
        %v573 = vpop.f32.mrf.mxu0
        %v574 = vadd.f32 0.0, %v573
        %v575 = vpop.f32.mrf.mxu0
        %v576 = vpop.f32.mrf.mxu0
        %v577 = vadd.f32 0.0, %v576
        %v578 = vpop.f32.mrf.mxu0
        %579 = vmatprep.mubr.bf16.mxu0 0
        %580 = vmatmul.mubr.bf16.gmra.mxu0 %v496
        %v581 = vpop.f32.mrf.mxu0
        %v582 = vadd.f32 0.0, %v581
        %v583 = vpop.f32.mrf.mxu0
        %v584 = vpop.f32.mrf.mxu0
        %v585 = vadd.f32 0.0, %v584
        %v586 = vpop.f32.mrf.mxu0
        %587 = vmatprep.mubr.bf16.mxu0 0
        %588 = vmatmul.mubr.bf16.gmra.mxu0 %v497
        %v589 = vpop.f32.mrf.mxu0
        %v590 = vadd.f32 0.0, %v589
        %v591 = vpop.f32.mrf.mxu0
        %v592 = vpop.f32.mrf.mxu0
        %v593 = vadd.f32 0.0, %v592
        %v594 = vpop.f32.mrf.mxu0
        %595 = vmatprep.mubr.bf16.mxu0 0
        %596 = vmatmul.mubr.bf16.gmra.mxu0 %v498
        %v597 = vpop.f32.mrf.mxu0
        %v598 = vadd.f32 0.0, %v597
        %v599 = vpop.f32.mrf.mxu0
        %v600 = vpop.f32.mrf.mxu0
        %v601 = vadd.f32 0.0, %v600
        %v602 = vpop.f32.mrf.mxu0
        %603 = vdwg.mxu0
        %v604 = vstv %s321
        %v605 = vadd.f32 %v542, %v604
        %v606 = vmax.f32 %v605, 0.0
        %v607 = vstv %s322
        %v608 = vadd.f32 %v545, %v607
        %v609 = vmax.f32 %v608, 0.0
        %v610 = vstv %s323
        %v611 = vadd.f32 %v550, %v610
        %v612 = vmax.f32 %v611, 0.0
        %v613 = vstv %s324
        %v614 = vadd.f32 %v553, %v613
        %v615 = vmax.f32 %v614, 0.0
        %v616 = vstv %s325
        %v617 = vadd.f32 %v558, %v616
        %v618 = vmax.f32 %v617, 0.0
        %v619 = vstv %s326
        %v620 = vadd.f32 %v561, %v619
        %v621 = vmax.f32 %v620, 0.0
        %v622 = vstv %s327
        %v623 = vadd.f32 %v566, %v622
        %v624 = vmax.f32 %v623, 0.0
        %v625 = vstv %s328
        %v626 = vadd.f32 %v569, %v625
        %v627 = vmax.f32 %v626, 0.0
        %v628 = vstv %s329
        %v629 = vadd.f32 %v574, %v628
        %v630 = vmax.f32 %v629, 0.0
        %v631 = vstv %s330
        %v632 = vadd.f32 %v577, %v631
        %v633 = vmax.f32 %v632, 0.0
        %v634 = vstv %s331
        %v635 = vadd.f32 %v582, %v634
        %v636 = vmax.f32 %v635, 0.0
        %v637 = vstv %s332
        %v638 = vadd.f32 %v585, %v637
        %v639 = vmax.f32 %v638, 0.0
        %v640 = vstv %s333
        %v641 = vadd.f32 %v590, %v640
        %v642 = vmax.f32 %v641, 0.0
        %v643 = vstv %s334
        %v644 = vadd.f32 %v593, %v643
        %v645 = vmax.f32 %v644, 0.0
        %v646 = vstv %s335
        %v647 = vadd.f32 %v598, %v646
        %v648 = vmax.f32 %v647, 0.0
        %v649 = vstv %s336
        %v650 = vadd.f32 %v601, %v649
        %v651 = vmax.f32 %v650, 0.0
        %v652 = vpack.c.bf16 %v609, %v606
        %v653 = vpack.c.bf16 %v615, %v612
        %v654 = vpack.c.bf16 %v621, %v618
        %v655 = vpack.c.bf16 %v627, %v624
        %v656 = vpack.c.bf16 %v633, %v630
        %v657 = vpack.c.bf16 %v639, %v636
        %v658 = vpack.c.bf16 %v645, %v642
        %v659 = vpack.c.bf16 %v651, %v648
        %v676 = vunpack.c.l.b16 %v273
        %v677 = vunpack.c.l.b16 %v274
        %v678 = vunpack.c.l.b16 %v275
        %v679 = vunpack.c.l.b16 %v276
        %v680 = vunpack.c.l.b16 %v277
        %v681 = vunpack.c.l.b16 %v278
        %v682 = vunpack.c.l.b16 %v279
        %v683 = vunpack.c.l.b16 %v280
        %v684 = vunpack.c.l.b16 %v281
        %v685 = vunpack.c.l.b16 %v282
        %v686 = vunpack.c.l.b16 %v283
        %v687 = vunpack.c.l.b16 %v284
        %v688 = vunpack.c.l.b16 %v285
        %v689 = vunpack.c.l.b16 %v286
        %v690 = vunpack.c.l.b16 %v287
        %v691 = vunpack.c.l.b16 %v288
        %v692 = vpack.c.b16 %v677, %v676
        %v693 = vpack.c.b16 %v679, %v678
        %v694 = vpack.c.b16 %v681, %v680
        %v695 = vpack.c.b16 %v683, %v682
        %v696 = vpack.c.b16 %v685, %v684
        %v697 = vpack.c.b16 %v687, %v686
        %v698 = vpack.c.b16 %v689, %v688
        %v699 = vpack.c.b16 %v691, %v690
        %708 = vmatprep.subr.bf16.mxu0 0
        %709 = vmatpush1.bf16.msra.mxu0 %v659
        %710 = vmatprep.subr.bf16.mxu0 0
        %711 = vmatpush1.bf16.msra.mxu0 %v658
        %712 = vmatprep.subr.bf16.mxu0 0
        %713 = vmatpush1.bf16.msra.mxu0 %v657
        %714 = vmatprep.subr.bf16.mxu0 0
        %715 = vmatpush1.bf16.msra.mxu0 %v656
        %716 = vmatprep.subr.bf16.mxu0 0
        %717 = vmatpush1.bf16.msra.mxu0 %v655
        %718 = vmatprep.subr.bf16.mxu0 0
        %719 = vmatpush1.bf16.msra.mxu0 %v654
        %720 = vmatprep.subr.bf16.mxu0 0
        %721 = vmatpush1.bf16.msra.mxu0 %v653
        %722 = vmatprep.subr.bf16.mxu0 0
        %723 = vmatpush1.bf16.msra.mxu0 %v652
        %724 = vmatprep.subr.bf16.mxu0 0
        %725 = vmatpush2.bf16.msra.mxu0 0
        %726 = vmatprep.subr.bf16.mxu0 0
        %727 = vmatpush2.bf16.msra.mxu0 0
        %728 = vmatprep.subr.bf16.mxu0 0
        %729 = vmatpush2.bf16.msra.mxu0 0
        %730 = vmatprep.subr.bf16.mxu0 0
        %731 = vmatpush2.bf16.msra.mxu0 0
        %732 = vmatprep.subr.bf16.mxu0 0
        %733 = vmatpush2.bf16.msra.mxu0 0
        %734 = vmatprep.subr.bf16.mxu0 0
        %735 = vmatpush2.bf16.msra.mxu0 0
        %736 = vmatprep.subr.bf16.mxu0 0
        %737 = vmatpush2.bf16.msra.mxu0 0
        %738 = vmatprep.subr.bf16.mxu0 0
        %739 = vmatpush2.bf16.msra.mxu0 0
        %740 = vmatprep.mubr.bf16.mxu0 0
        %741 = vmatmul.mubr.bf16.gmra.mxu0 %v692
        %v742 = vpop.f32.mrf.mxu0
        %v743 = vadd.f32 0.0, %v742
        %v744 = vpop.f32.mrf.mxu0
        %v745 = vpop.f32.mrf.mxu0
        %v746 = vadd.f32 0.0, %v745
        %v747 = vpop.f32.mrf.mxu0
        %748 = vmatprep.mubr.bf16.mxu0 0
        %749 = vmatmul.mubr.bf16.gmra.mxu0 %v693
        %v750 = vpop.f32.mrf.mxu0
        %v751 = vadd.f32 0.0, %v750
        %v752 = vpop.f32.mrf.mxu0
        %v753 = vpop.f32.mrf.mxu0
        %v754 = vadd.f32 0.0, %v753
        %v755 = vpop.f32.mrf.mxu0
        %756 = vmatprep.mubr.bf16.mxu0 0
        %757 = vmatmul.mubr.bf16.gmra.mxu0 %v694
        %v758 = vpop.f32.mrf.mxu0
        %v759 = vadd.f32 0.0, %v758
        %v760 = vpop.f32.mrf.mxu0
        %v761 = vpop.f32.mrf.mxu0
        %v762 = vadd.f32 0.0, %v761
        %v763 = vpop.f32.mrf.mxu0
        %764 = vmatprep.mubr.bf16.mxu0 0
        %765 = vmatmul.mubr.bf16.gmra.mxu0 %v695
        %v766 = vpop.f32.mrf.mxu0
        %v767 = vadd.f32 0.0, %v766
        %v768 = vpop.f32.mrf.mxu0
        %v769 = vpop.f32.mrf.mxu0
        %v770 = vadd.f32 0.0, %v769
        %v771 = vpop.f32.mrf.mxu0
        %772 = vmatprep.mubr.bf16.mxu0 0
        %773 = vmatmul.mubr.bf16.gmra.mxu0 %v696
        %v774 = vpop.f32.mrf.mxu0
        %v775 = vadd.f32 0.0, %v774
        %v776 = vpop.f32.mrf.mxu0
        %v777 = vpop.f32.mrf.mxu0
        %v778 = vadd.f32 0.0, %v777
        %v779 = vpop.f32.mrf.mxu0
        %780 = vmatprep.mubr.bf16.mxu0 0
        %781 = vmatmul.mubr.bf16.gmra.mxu0 %v697
        %v782 = vpop.f32.mrf.mxu0
        %v783 = vadd.f32 0.0, %v782
        %v784 = vpop.f32.mrf.mxu0
        %v785 = vpop.f32.mrf.mxu0
        %v786 = vadd.f32 0.0, %v785
        %v787 = vpop.f32.mrf.mxu0
        %788 = vmatprep.mubr.bf16.mxu0 0
        %789 = vmatmul.mubr.bf16.gmra.mxu0 %v698
        %v790 = vpop.f32.mrf.mxu0
        %v791 = vadd.f32 0.0, %v790
        %v792 = vpop.f32.mrf.mxu0
        %v793 = vpop.f32.mrf.mxu0
        %v794 = vadd.f32 0.0, %v793
        %v795 = vpop.f32.mrf.mxu0
        %796 = vmatprep.mubr.bf16.mxu0 0
        %797 = vmatmul.mubr.bf16.gmra.mxu0 %v699
        %v798 = vpop.f32.mrf.mxu0
        %v799 = vadd.f32 0.0, %v798
        %v800 = vpop.f32.mrf.mxu0
        %v801 = vpop.f32.mrf.mxu0
        %v802 = vadd.f32 0.0, %v801
        %v803 = vpop.f32.mrf.mxu0
        %804 = vdwg.mxu0
        %v805 = vstv %s337
        %v806 = vadd.f32 %v743, %v805
        %v807 = vmax.f32 %v806, 0.0
        %v808 = vstv %s353
        %v809 = vmul.f32 %v807, %v808
        %v810 = vstv %s338
        %v811 = vadd.f32 %v746, %v810
        %v812 = vmax.f32 %v811, 0.0
        %v813 = vstv %s354
        %v814 = vmul.f32 %v812, %v813
        %v815 = vadd.f32 %v809, %v814
        %v816 = vstv %s339
        %v817 = vadd.f32 %v751, %v816
        %v818 = vmax.f32 %v817, 0.0
        %v819 = vstv %s355
        %v820 = vmul.f32 %v818, %v819
        %v821 = vadd.f32 %v815, %v820
        %v822 = vstv %s340
        %v823 = vadd.f32 %v754, %v822
        %v824 = vmax.f32 %v823, 0.0
        %v825 = vstv %s356
        %v826 = vmul.f32 %v824, %v825
        %v827 = vadd.f32 %v821, %v826
        %v828 = vstv %s341
        %v829 = vadd.f32 %v759, %v828
        %v830 = vmax.f32 %v829, 0.0
        %v831 = vstv %s357
        %v832 = vmul.f32 %v830, %v831
        %v833 = vadd.f32 %v827, %v832
        %v834 = vstv %s342
        %v835 = vadd.f32 %v762, %v834
        %v836 = vmax.f32 %v835, 0.0
        %v837 = vstv %s358
        %v838 = vmul.f32 %v836, %v837
        %v839 = vadd.f32 %v833, %v838
        %v840 = vstv %s343
        %v841 = vadd.f32 %v767, %v840
        %v842 = vmax.f32 %v841, 0.0
        %v843 = vstv %s359
        %v844 = vmul.f32 %v842, %v843
        %v845 = vadd.f32 %v839, %v844
        %v846 = vstv %s344
        %v847 = vadd.f32 %v770, %v846
        %v848 = vmax.f32 %v847, 0.0
        %v849 = vstv %s360
        %v850 = vmul.f32 %v848, %v849
        %v851 = vadd.f32 %v845, %v850
        %v852 = vstv %s345
        %v853 = vadd.f32 %v775, %v852
        %v854 = vmax.f32 %v853, 0.0
        %v855 = vstv %s361
        %v856 = vmul.f32 %v854, %v855
        %v857 = vadd.f32 %v851, %v856
        %v858 = vstv %s346
        %v859 = vadd.f32 %v778, %v858
        %v860 = vmax.f32 %v859, 0.0
        %v861 = vstv %s362
        %v862 = vmul.f32 %v860, %v861
        %v863 = vadd.f32 %v857, %v862
        %v864 = vstv %s347
        %v865 = vadd.f32 %v783, %v864
        %v866 = vmax.f32 %v865, 0.0
        %v867 = vstv %s363
        %v868 = vmul.f32 %v866, %v867
        %v869 = vadd.f32 %v863, %v868
        %v870 = vstv %s348
        %v871 = vadd.f32 %v786, %v870
        %v872 = vmax.f32 %v871, 0.0
        %v873 = vstv %s364
        %v874 = vmul.f32 %v872, %v873
        %v875 = vadd.f32 %v869, %v874
        %v876 = vstv %s349
        %v877 = vadd.f32 %v791, %v876
        %v878 = vmax.f32 %v877, 0.0
        %v879 = vstv %s365
        %v880 = vmul.f32 %v878, %v879
        %v881 = vadd.f32 %v875, %v880
        %v882 = vstv %s350
        %v883 = vadd.f32 %v794, %v882
        %v884 = vmax.f32 %v883, 0.0
        %v885 = vstv %s366
        %v886 = vmul.f32 %v884, %v885
        %v887 = vadd.f32 %v881, %v886
        %v888 = vstv %s351
        %v889 = vadd.f32 %v799, %v888
        %v890 = vmax.f32 %v889, 0.0
        %v891 = vstv %s367
        %v892 = vmul.f32 %v890, %v891
        %v893 = vadd.f32 %v887, %v892
        %v894 = vstv %s352
        %v895 = vadd.f32 %v802, %v894
        %v896 = vmax.f32 %v895, 0.0
        %v897 = vstv %s368
        %v898 = vmul.f32 %v896, %v897
        %v899 = vadd.f32 %v893, %v898
        %v900 = vstv %s369
        %v901 = vadd.f32 %v899, %v900
        %v902 = vadd.f32 %v901, %v370
        %v903 = vmul.f32 %v902, 0.5
        %v904 = vtanh.pop %v903
        %v905 = vmul.f32 %v904, 0.5
        %v906 = vadd.f32 %v905, 0.5
        %907 = vst [vmem:[%s255] sm:$0xff] %v906
        %s908 = sand.u32 %s120, 1
        %s909 = scalar_lea.sflag [#allocation4], %s908
        %s910 = sand.u32 %s120, 1
        %s911 = smul.addr %s910, 8
        %s912 = scalar_lea.vmem [#allocation10], %s911
        // Predicated region
        $region53: #{tpu_custom_call.1} parent=35 // pred_check
          %p913 = pneg %p130
        $region54: #{tpu_custom_call.1} parent=35 // pred_check_branch
          %915 = sbr.rel (%p913) target = $region56
        $region55: #{tpu_custom_call.1} parent=35 // pred_region
          %s917 = ssub.s32 128, 128
          %918 = vsyncadd %s909, %s917
          %s919 = smul.addr %s23, 128
          %s920 = scalar_lea.hbm %s4, %s919
          %s922 = sshll.u32 %s912, 4
          %s923 = int_to_ptr.vmem [resolvable:$true] %s922
          %925 = dma.vmem_to_hbm [thread:$0]  %s923, 128, %s920, %s909
        $region56: #{tpu_custom_call.1} parent=35 // pred_fallthru
          _
      $region36: #{tpu_custom_call.1} parent=5 // pred_fallthru
        _
      %p926 = scmp.le.s32.totalorder 2, %s18
      // Predicated region
      $region57: #{tpu_custom_call.1} parent=5 // pred_check
        %p927 = pneg %p926
      $region58: #{tpu_custom_call.1} parent=5 // pred_check_branch
        %929 = sbr.rel (%p927) target = $region60
      $region59: #{tpu_custom_call.1} parent=5 // pred_region
        %s930 = ssub.s32 %s18, 2
        // Predicated region
        $region61: #{tpu_custom_call.1} parent=59 // pred_check
          %p931 = pneg %p136
        $region62: #{tpu_custom_call.1} parent=59 // pred_check_branch
          %933 = sbr.rel (%p931) target = $region64
        $region63: #{tpu_custom_call.1} parent=59 // pred_region
          %s934 = sand.u32 %s121, 1
          %s935 = scalar_lea.sflag [#allocation4], %s934
          %s936 = sand.u32 %s121, 1
          %s937 = smul.addr %s936, 8
          %s938 = scalar_lea.vmem [#allocation10], %s937
          %939 = dma.done %s935, 128
        $region64: #{tpu_custom_call.1} parent=59 // pred_fallthru
          _
      $region60: #{tpu_custom_call.1} parent=5 // pred_fallthru
        _
    $region6: #{tpu_custom_call.1} parent=1 // loop_footer
      %s22 = sadd.s32 1, %s18
    $region7: #{tpu_custom_call.1} parent=1 // loop_footer_branch
      %17 = sbr.rel target = $region3
    $region8: #{tpu_custom_call.1} parent=1 // loop_exit
      _
    %940 = vsyncpa [#allocation3], 1
    %s941 = scalar_lea.sflag [#allocation3], 1
    %942 = vsyncpa %s941, 1
    %943 = vsyncpa [#allocation7], 1
    %944 = vsyncpa [#allocation4], 1
    %s945 = scalar_lea.sflag [#allocation4], 1
    %946 = vsyncpa %s945, 1
    %947 = vsyncpa [#allocation5], 1
    %s948 = scalar_lea.sflag [#allocation5], 1
    %949 = vsyncpa %s948, 1

</llo_original>
